<compile_context>
chip_gen: v7x
topology: tpu7x:2x2x1
jax: 0.10.0
libtpu: 0.0.40
codegen_flags: <defaults>
</compile_context>

<pallas_src>
import functools

import jax
import jax.numpy as jnp
from jax.experimental import pallas as pl
from jax.experimental.pallas import tpu as pltpu

BN_EPS = 1e-5  # PyTorch BatchNorm default


# ----------------------------- in-kernel helpers -----------------------------

def _gelu_tanh(x):
    # tanh-form GELU: transcendental goes to the EUP slot (bf16-capable on v6+).
    c = 0.7978845608028654  # sqrt(2/pi)
    return 0.5 * x * (1.0 + jnp.tanh(c * (x + 0.044715 * x * x * x)))


def _fold_bn(gamma, beta, mean, var, eps=BN_EPS):
    scale = gamma * jax.lax.rsqrt(var + eps)
    shift = beta - mean * scale
    return scale.reshape(1, -1), shift.reshape(1, -1)


# --------------------------------- kernel ------------------------------------

def stem_kernel(x_ref, w1_ref, w2_ref, w3_ref,
                sh1_ref, sh2_ref, sh3_ref, out_ref, *, ep_dtype):
    # x_ref : (1, 1, 16*Pt, K1) bf16, rows ordered (s, q, p_local)
    # w1    : (K1, C) bf16 (BN1 scale folded in)
    # w2    : (4, C, C) bf16 (BN2 scale folded in)
    # w3    : (4, C, D) bf16 (BN3 scale folded in)
    # shX   : folded BN shifts, ep_dtype, shapes (1, C)/(1, C)/(1, D)
    rows = x_ref.shape[2]
    Pt = rows // 16

    # ---- stage 1: 4x4/stride-4 conv == one [16*Pt, K1] @ [K1, C] matmul ----
    x = x_ref[0, 0]
    h1 = jnp.dot(x, w1_ref[...], preferred_element_type=jnp.float32)
    h1 = _gelu_tanh(h1.astype(ep_dtype) + sh1_ref[...])
    h1 = h1.astype(jnp.bfloat16)            # single cast; no-op if ep is bf16

    # ---- stage 2: 2x2/stride-2 conv == 4 accumulated matmuls over pos s ----
    # rows ordered (s, q, p): each position s is a contiguous [4*Pt, C] slab.
    acc2 = jnp.dot(h1[0:4 * Pt, :], w2_ref[0],
                   preferred_element_type=jnp.float32)
    for s in range(1, 4):
        acc2 = acc2 + jnp.dot(h1[s * 4 * Pt:(s + 1) * 4 * Pt, :], w2_ref[s],
                              preferred_element_type=jnp.float32)
    h2 = _gelu_tanh(acc2.astype(ep_dtype) + sh2_ref[...])
    h2 = h2.astype(jnp.bfloat16)

    # ---- stage 3: 2x2/stride-2 conv over the quadrant grid (rows (q, p)) ---
    acc3 = jnp.dot(h2[0:Pt, :], w3_ref[0],
                   preferred_element_type=jnp.float32)
    for q in range(1, 4):
        acc3 = acc3 + jnp.dot(h2[q * Pt:(q + 1) * Pt, :], w3_ref[q],
                              preferred_element_type=jnp.float32)
    out_ref[0] = (acc3.astype(ep_dtype) + sh3_ref[...]).astype(out_ref.dtype)


# --------------------------------- wrapper -----------------------------------

def _device_kind():
    try:
        return jax.devices()[0].device_kind.lower()
    except Exception:
        return ""


def _round_up(x, m):
    return (x + m - 1) // m * m


def _choose_tiling(P, max_tile=128):
    # Pt multiple of 8; prefer fewest grid steps (but >= 2 so the pipeline has
    # something to overlap and megacore / 2 TCs can split work even at B == 1),
    # then least token padding, then larger tiles.
    best = None
    for pt in range(8, max_tile + 1, 8):
        nt = max(2, pl.cdiv(P, pt))
        pad = pt * nt - P
        key = (nt, pad, -pt)
        if best is None or key < best[0]:
            best = (key, pt, nt)
    return best[1], best[2]


def hmlp_stem_forward(x, params, *, token_tile=None, out_dtype=jnp.bfloat16):
    B, Cin, H, W = x.shape
    assert H % 16 == 0 and W % 16 == 0, "H, W must be multiples of 16"
    gh, gw = H // 16, W // 16
    P = gh * gw
    K1 = Cin * 16
    C = params["w1"].shape[1]
    D = params["w3"].shape[2]

    if token_tile is None:
        Pt, n_tiles = _choose_tiling(P)
    else:
        Pt = int(token_tile)
        assert Pt % 8 == 0, "token_tile must be a multiple of 8"
        n_tiles = max(1, pl.cdiv(P, Pt))
    P_pad = Pt * n_tiles

    kind = _device_kind()
    # v5e (and older) have no bf16 VALU/EUP -> keep the epilogue in f32 there.
    use_bf16_ep = ("v6" in kind) or ("v7" in kind)
    ep_dtype = jnp.bfloat16 if use_bf16_ep else jnp.float32

    # ------------------ XLA glue: hierarchical im2col layout -----------------
    # pixel index i = 16*ty + 8*r2 + 4*sr + ph  (same for j with tx/c2/sc/pw);
    # cast to bf16 *before* the shuffle to halve its HBM traffic.
    xb = x.astype(jnp.bfloat16)
    xr = xb.reshape(B, Cin, gh, 2, 2, 4, gw, 2, 2, 4)
    #              (B, cin, ty, r2, sr, ph, tx, c2, sc, pw)
    xr = xr.transpose(0, 4, 8, 3, 7, 2, 6, 1, 5, 9)
    #              (B, sr, sc, r2, c2, ty, tx, cin, ph, pw)
    xr = xr.reshape(B, 4, 4, P, K1)                    # (B, s, q, token, k)
    if P_pad != P:
        xr = jnp.pad(xr, ((0, 0), (0, 0), (0, 0), (0, P_pad - P), (0, 0)))
    xr = xr.reshape(B, 4, 4, n_tiles, Pt, K1)
    xr = xr.transpose(0, 3, 1, 2, 4, 5)                # (B, tile, s, q, p, k)
    patches = xr.reshape(B, n_tiles, 16 * Pt, K1)

    # --------- fold BN (inference running stats) into weights / shifts -------
    sc1, sh1 = _fold_bn(params["bn1_gamma"], params["bn1_beta"],
                        params["bn1_mean"], params["bn1_var"])
    sc2, sh2 = _fold_bn(params["bn2_gamma"], params["bn2_beta"],
                        params["bn2_mean"], params["bn2_var"])
    sc3, sh3 = _fold_bn(params["bn3_gamma"], params["bn3_beta"],
                        params["bn3_mean"], params["bn3_var"])
    w1 = (params["w1"] * sc1).astype(jnp.bfloat16)     # scale per out-channel
    w2 = (params["w2"] * sc2).astype(jnp.bfloat16)     # broadcasts on last axis
    w3 = (params["w3"] * sc3).astype(jnp.bfloat16)
    sh1 = sh1.astype(ep_dtype)
    sh2 = sh2.astype(ep_dtype)
    sh3 = sh3.astype(ep_dtype)

    # ---- scoped-VMEM budget with lane/sublane-padded shapes, gated cap ------
    K1p, Cp, Dp = _round_up(K1, 128), _round_up(C, 128), _round_up(D, 128)
    out_isz = jnp.dtype(out_dtype).itemsize
    x_tile = 2 * (16 * Pt) * K1p * 2                   # 2 buffers, bf16, padded
    out_tile = 2 * Pt * Dp * out_isz
    w_bytes = 2 * (_round_up(K1, 16) * Cp + 4 * C * Cp + 4 * C * Dp) * 2
    sh_bytes = 2 * (2 * Cp + Dp) * 4
    tmp = (16 * Pt * Cp * 6 + 4 * Pt * Cp * 6 + Pt * Dp * 4) * 2
    cap = (48 if "v7" in kind else 96) * 2 ** 20
    vmem_limit = int(min(cap, max(x_tile + out_tile + w_bytes + sh_bytes + tmp,
                                  32 * 2 ** 20)))

    kernel = functools.partial(stem_kernel, ep_dtype=ep_dtype)
    out = pl.pallas_call(
        kernel,
        out_shape=jax.ShapeDtypeStruct((B, P_pad, D), out_dtype),
        grid=(B, n_tiles),
        in_specs=[
            pl.BlockSpec((1, 1, 16 * Pt, K1), lambda b, t: (b, t, 0, 0)),
            pl.BlockSpec((K1, C), lambda b, t: (0, 0)),
            pl.BlockSpec((4, C, C), lambda b, t: (0, 0, 0)),
            pl.BlockSpec((4, C, D), lambda b, t: (0, 0, 0)),
            pl.BlockSpec((1, C), lambda b, t: (0, 0)),
            pl.BlockSpec((1, C), lambda b, t: (0, 0)),
            pl.BlockSpec((1, D), lambda b, t: (0, 0)),
        ],
        out_specs=pl.BlockSpec((1, Pt, D), lambda b, t: (b, t, 0)),
        compiler_params=pltpu.CompilerParams(
            dimension_semantics=("parallel", "parallel"),
            vmem_limit_bytes=vmem_limit),
    )(patches, w1, w2, w3, sh1, sh2, sh3)
    return out[:, :P, :]


# --------------------------- deterministic params -----------------------------

def init_params(key, *, in_chans, embed_dim):
    C = embed_dim // 4
    K1 = in_chans * 16
    ks = jax.random.split(key, 6)

    def tn(k, shape, std):
        return std * jax.random.truncated_normal(k, -2.0, 2.0, shape, jnp.float32)

    # conv weights stored in matmul (im2col) layout:
    #   w1: [K1=(cin,ph,pw), C]   w2: [4=(kh,kw), C, C]   w3: [4=(kh,kw), C, D]
    p = {
        "w1": tn(ks[0], (K1, C), K1 ** -0.5),
        "w2": tn(ks[1], (4, C, C), (4 * C) ** -0.5),
        "w3": tn(ks[2], (4, C, embed_dim), (4 * C) ** -0.5),
    }
    for i, (ch, kk) in enumerate(((C, ks[3]), (C, ks[4]), (embed_dim, ks[5])),
                                 start=1):
        kg, kb, km, kv = jax.random.split(kk, 4)
        p[f"bn{i}_gamma"] = 1.0 + 0.1 * jax.random.normal(kg, (ch,), jnp.float32)
        p[f"bn{i}_beta"] = 0.05 * jax.random.normal(kb, (ch,), jnp.float32)
        p[f"bn{i}_mean"] = 0.1 * jax.random.normal(km, (ch,), jnp.float32)
        p[f"bn{i}_var"] = 1.0 + 0.1 * jax.random.uniform(kv, (ch,), jnp.float32)
    return p


# --------------------------- pure-JAX reference -------------------------------

def reference_forward(x, params):
    B, Cin, H, W = x.shape
    C = params["w1"].shape[1]
    D = params["w3"].shape[2]
    dn = ("NCHW", "OIHW", "NCHW")
    w1c = params["w1"].reshape(Cin, 4, 4, C).transpose(3, 0, 1, 2)
    w2c = params["w2"].reshape(2, 2, C, C).transpose(3, 2, 0, 1)
    w3c = params["w3"].reshape(2, 2, C, D).transpose(3, 2, 0, 1)

    def bn(y, i):
        s, b = _fold_bn(params[f"bn{i}_gamma"], params[f"bn{i}_beta"],
                        params[f"bn{i}_mean"], params[f"bn{i}_var"])
        return y * s.reshape(1, -1, 1, 1) + b.reshape(1, -1, 1, 1)

    y = jax.lax.conv_general_dilated(x, w1c, (4, 4), "VALID",
                                     dimension_numbers=dn)
    y = _gelu_tanh(bn(y, 1))
    y = jax.lax.conv_general_dilated(y, w2c, (2, 2), "VALID",
                                     dimension_numbers=dn)
    y = _gelu_tanh(bn(y, 2))
    y = jax.lax.conv_general_dilated(y, w3c, (2, 2), "VALID",
                                     dimension_numbers=dn)
    y = bn(y, 3)
    return y.reshape(B, D, -1).transpose(0, 2, 1)   # flatten(2).transpose(1,2)


# ----------------------------------- main -------------------------------------

if __name__ == "__main__":
    B, Cin, H, W = 2, 3, 64, 64          # H, W multiples of 16 (patch_size)
    embed_dim = 128                      # small stand-in for 768

    key = jax.random.PRNGKey(0)
    kx, kp = jax.random.split(key)
    x = jax.random.normal(kx, (B, Cin, H, W), jnp.float32)
    params = init_params(kp, in_chans=Cin, embed_dim=embed_dim)

    fwd = jax.jit(hmlp_stem_forward)
    out = fwd(x, params)
    jax.block_until_ready(out)

    P = (H // 16) * (W // 16)
    assert out.shape == (B, P, embed_dim)
    out_f32 = out.astype(jnp.float32)
    assert bool(jnp.all(jnp.isfinite(out_f32)))

    ref = reference_forward(x, params)
    err = float(jnp.max(jnp.abs(out_f32 - ref)) / (jnp.max(jnp.abs(ref)) + 1e-6))
    assert err < 5e-2, f"mismatch vs reference: {err}"
    print("KERNEL_OK")
</pallas_src>

<mosaic_0001>
module attributes {stable_mosaic.version = 11 : i64} {
  func.func @stem_kernel(%arg0: i32, %arg1: i32, %arg2: memref<1x1x128x48xbf16, #tpu.memory_space<vmem>>, %arg3: memref<48x32xbf16, #tpu.memory_space<vmem>>, %arg4: memref<4x32x32xbf16, #tpu.memory_space<vmem>>, %arg5: memref<4x32x128xbf16, #tpu.memory_space<vmem>>, %arg6: memref<1x32xf32, #tpu.memory_space<vmem>>, %arg7: memref<1x32xf32, #tpu.memory_space<vmem>>, %arg8: memref<1x128xf32, #tpu.memory_space<vmem>>, %arg9: memref<1x8x128xbf16, #tpu.memory_space<vmem>>) attributes {dimension_semantics = [#tpu.dimension_semantics<parallel>, #tpu.dimension_semantics<parallel>], iteration_bounds = array<i64: 2, 2>, scalar_prefetch = 0 : i64, scratch_operands = 0 : i64, tpu.core_type = #tpu.core_type<tc>, window_params = [{transform_indices = @transform_0, window_bounds = array<i64: 1, 1, 128, 48>}, {pipeline_mode = #tpu.pipeline_mode<synchronous>, transform_indices = @transform_1, window_bounds = array<i64: 48, 32>}, {pipeline_mode = #tpu.pipeline_mode<synchronous>, transform_indices = @transform_2, window_bounds = array<i64: 4, 32, 32>}, {pipeline_mode = #tpu.pipeline_mode<synchronous>, transform_indices = @transform_3, window_bounds = array<i64: 4, 32, 128>}, {pipeline_mode = #tpu.pipeline_mode<synchronous>, transform_indices = @transform_4, window_bounds = array<i64: 1, 32>}, {pipeline_mode = #tpu.pipeline_mode<synchronous>, transform_indices = @transform_5, window_bounds = array<i64: 1, 32>}, {pipeline_mode = #tpu.pipeline_mode<synchronous>, transform_indices = @transform_6, window_bounds = array<i64: 1, 128>}, {transform_indices = @transform_7, window_bounds = array<i64: 1, 8, 128>}]} {
    %c0 = arith.constant 0 : index
    %c0_0 = arith.constant 0 : index
    %c0_1 = arith.constant 0 : index
    %c0_2 = arith.constant 0 : index
    %0 = vector.load %arg2[%c0, %c0_0, %c0_1, %c0_2] : memref<1x1x128x48xbf16, #tpu.memory_space<vmem>>, vector<1x1x128x48xbf16>
    %1 = vector.shape_cast %0 : vector<1x1x128x48xbf16> to vector<128x48xbf16>
    %c0_3 = arith.constant 0 : index
    %c0_4 = arith.constant 0 : index
    %2 = vector.load %arg3[%c0_3, %c0_4] : memref<48x32xbf16, #tpu.memory_space<vmem>>, vector<48x32xbf16>
    %cst = arith.constant dense<0.000000e+00> : vector<128x32xf32>
    %3 = tpu.matmul %1, %2, %cst {dimension_numbers = #tpu.dot_dimension_numbers<[1], [0], [0], [1], [0, 0, 1, 1], [], []>} : vector<128x48xbf16>, vector<48x32xbf16>, vector<128x32xf32> -> vector<128x32xf32>
    %c0_5 = arith.constant 0 : index
    %c0_6 = arith.constant 0 : index
    %4 = vector.load %arg6[%c0_5, %c0_6] : memref<1x32xf32, #tpu.memory_space<vmem>>, vector<1x32xf32>
    %5 = vector.broadcast %4 : vector<1x32xf32> to vector<128x32xf32>
    %6 = arith.addf %3, %5 : vector<128x32xf32>
    %cst_7 = arith.constant 5.000000e-01 : f32
    %7 = vector.broadcast %cst_7 : f32 to vector<128x32xf32>
    %8 = arith.mulf %7, %6 : vector<128x32xf32>
    %cst_8 = arith.constant 4.471500e-02 : f32
    %9 = vector.broadcast %cst_8 : f32 to vector<128x32xf32>
    %10 = arith.mulf %9, %6 : vector<128x32xf32>
    %11 = arith.mulf %10, %6 : vector<128x32xf32>
    %12 = arith.mulf %11, %6 : vector<128x32xf32>
    %13 = arith.addf %6, %12 : vector<128x32xf32>
    %cst_9 = arith.constant 0.797884583 : f32
    %14 = vector.broadcast %cst_9 : f32 to vector<128x32xf32>
    %15 = arith.mulf %14, %13 : vector<128x32xf32>
    %16 = math.tanh %15 : vector<128x32xf32>
    %cst_10 = arith.constant 1.000000e+00 : f32
    %17 = vector.broadcast %cst_10 : f32 to vector<128x32xf32>
    %18 = arith.addf %17, %16 : vector<128x32xf32>
    %19 = arith.mulf %8, %18 : vector<128x32xf32>
    %20 = arith.truncf %19 : vector<128x32xf32> to vector<128x32xbf16>
    %21 = vector.extract_strided_slice %20 {offsets = [0, 0], sizes = [32, 32], strides = [1, 1]} : vector<128x32xbf16> to vector<32x32xbf16>
    %c0_11 = arith.constant 0 : index
    %c0_12 = arith.constant 0 : index
    %c0_13 = arith.constant 0 : index
    %22 = vector.load %arg4[%c0_11, %c0_12, %c0_13] : memref<4x32x32xbf16, #tpu.memory_space<vmem>>, vector<1x32x32xbf16>
    %23 = vector.shape_cast %22 : vector<1x32x32xbf16> to vector<32x32xbf16>
    %cst_14 = arith.constant dense<0.000000e+00> : vector<32x32xf32>
    %24 = tpu.matmul %21, %23, %cst_14 {dimension_numbers = #tpu.dot_dimension_numbers<[1], [0], [0], [1], [0, 0, 1, 1], [], []>} : vector<32x32xbf16>, vector<32x32xbf16>, vector<32x32xf32> -> vector<32x32xf32>
    %25 = vector.extract_strided_slice %20 {offsets = [32, 0], sizes = [32, 32], strides = [1, 1]} : vector<128x32xbf16> to vector<32x32xbf16>
    %c1 = arith.constant 1 : index
    %c0_15 = arith.constant 0 : index
    %c0_16 = arith.constant 0 : index
    %26 = vector.load %arg4[%c1, %c0_15, %c0_16] : memref<4x32x32xbf16, #tpu.memory_space<vmem>>, vector<1x32x32xbf16>
    %27 = vector.shape_cast %26 : vector<1x32x32xbf16> to vector<32x32xbf16>
    %cst_17 = arith.constant dense<0.000000e+00> : vector<32x32xf32>
    %28 = tpu.matmul %25, %27, %cst_17 {dimension_numbers = #tpu.dot_dimension_numbers<[1], [0], [0], [1], [0, 0, 1, 1], [], []>} : vector<32x32xbf16>, vector<32x32xbf16>, vector<32x32xf32> -> vector<32x32xf32>
    %29 = arith.addf %24, %28 : vector<32x32xf32>
    %30 = vector.extract_strided_slice %20 {offsets = [64, 0], sizes = [32, 32], strides = [1, 1]} : vector<128x32xbf16> to vector<32x32xbf16>
    %c2 = arith.constant 2 : index
    %c0_18 = arith.constant 0 : index
    %c0_19 = arith.constant 0 : index
    %31 = vector.load %arg4[%c2, %c0_18, %c0_19] : memref<4x32x32xbf16, #tpu.memory_space<vmem>>, vector<1x32x32xbf16>
    %32 = vector.shape_cast %31 : vector<1x32x32xbf16> to vector<32x32xbf16>
    %cst_20 = arith.constant dense<0.000000e+00> : vector<32x32xf32>
    %33 = tpu.matmul %30, %32, %cst_20 {dimension_numbers = #tpu.dot_dimension_numbers<[1], [0], [0], [1], [0, 0, 1, 1], [], []>} : vector<32x32xbf16>, vector<32x32xbf16>, vector<32x32xf32> -> vector<32x32xf32>
    %34 = arith.addf %29, %33 : vector<32x32xf32>
    %35 = vector.extract_strided_slice %20 {offsets = [96, 0], sizes = [32, 32], strides = [1, 1]} : vector<128x32xbf16> to vector<32x32xbf16>
    %c3 = arith.constant 3 : index
    %c0_21 = arith.constant 0 : index
    %c0_22 = arith.constant 0 : index
    %36 = vector.load %arg4[%c3, %c0_21, %c0_22] : memref<4x32x32xbf16, #tpu.memory_space<vmem>>, vector<1x32x32xbf16>
    %37 = vector.shape_cast %36 : vector<1x32x32xbf16> to vector<32x32xbf16>
    %cst_23 = arith.constant dense<0.000000e+00> : vector<32x32xf32>
    %38 = tpu.matmul %35, %37, %cst_23 {dimension_numbers = #tpu.dot_dimension_numbers<[1], [0], [0], [1], [0, 0, 1, 1], [], []>} : vector<32x32xbf16>, vector<32x32xbf16>, vector<32x32xf32> -> vector<32x32xf32>
    %39 = arith.addf %34, %38 : vector<32x32xf32>
    %c0_24 = arith.constant 0 : index
    %c0_25 = arith.constant 0 : index
    %40 = vector.load %arg7[%c0_24, %c0_25] : memref<1x32xf32, #tpu.memory_space<vmem>>, vector<1x32xf32>
    %41 = vector.broadcast %40 : vector<1x32xf32> to vector<32x32xf32>
    %42 = arith.addf %39, %41 : vector<32x32xf32>
    %cst_26 = arith.constant 5.000000e-01 : f32
    %43 = vector.broadcast %cst_26 : f32 to vector<32x32xf32>
    %44 = arith.mulf %43, %42 : vector<32x32xf32>
    %cst_27 = arith.constant 4.471500e-02 : f32
    %45 = vector.broadcast %cst_27 : f32 to vector<32x32xf32>
    %46 = arith.mulf %45, %42 : vector<32x32xf32>
    %47 = arith.mulf %46, %42 : vector<32x32xf32>
    %48 = arith.mulf %47, %42 : vector<32x32xf32>
    %49 = arith.addf %42, %48 : vector<32x32xf32>
    %cst_28 = arith.constant 0.797884583 : f32
    %50 = vector.broadcast %cst_28 : f32 to vector<32x32xf32>
    %51 = arith.mulf %50, %49 : vector<32x32xf32>
    %52 = math.tanh %51 : vector<32x32xf32>
    %cst_29 = arith.constant 1.000000e+00 : f32
    %53 = vector.broadcast %cst_29 : f32 to vector<32x32xf32>
    %54 = arith.addf %53, %52 : vector<32x32xf32>
    %55 = arith.mulf %44, %54 : vector<32x32xf32>
    %56 = arith.truncf %55 : vector<32x32xf32> to vector<32x32xbf16>
    %57 = vector.extract_strided_slice %56 {offsets = [0, 0], sizes = [8, 32], strides = [1, 1]} : vector<32x32xbf16> to vector<8x32xbf16>
    %c0_30 = arith.constant 0 : index
    %c0_31 = arith.constant 0 : index
    %c0_32 = arith.constant 0 : index
    %58 = vector.load %arg5[%c0_30, %c0_31, %c0_32] : memref<4x32x128xbf16, #tpu.memory_space<vmem>>, vector<1x32x128xbf16>
    %59 = vector.shape_cast %58 : vector<1x32x128xbf16> to vector<32x128xbf16>
    %cst_33 = arith.constant dense<0.000000e+00> : vector<8x128xf32>
    %60 = tpu.matmul %57, %59, %cst_33 {dimension_numbers = #tpu.dot_dimension_numbers<[1], [0], [0], [1], [0, 0, 1, 1], [], []>} : vector<8x32xbf16>, vector<32x128xbf16>, vector<8x128xf32> -> vector<8x128xf32>
    %61 = vector.extract_strided_slice %56 {offsets = [8, 0], sizes = [8, 32], strides = [1, 1]} : vector<32x32xbf16> to vector<8x32xbf16>
    %c1_34 = arith.constant 1 : index
    %c0_35 = arith.constant 0 : index
    %c0_36 = arith.constant 0 : index
    %62 = vector.load %arg5[%c1_34, %c0_35, %c0_36] : memref<4x32x128xbf16, #tpu.memory_space<vmem>>, vector<1x32x128xbf16>
    %63 = vector.shape_cast %62 : vector<1x32x128xbf16> to vector<32x128xbf16>
    %cst_37 = arith.constant dense<0.000000e+00> : vector<8x128xf32>
    %64 = tpu.matmul %61, %63, %cst_37 {dimension_numbers = #tpu.dot_dimension_numbers<[1], [0], [0], [1], [0, 0, 1, 1], [], []>} : vector<8x32xbf16>, vector<32x128xbf16>, vector<8x128xf32> -> vector<8x128xf32>
    %65 = arith.addf %60, %64 : vector<8x128xf32>
    %66 = vector.extract_strided_slice %56 {offsets = [16, 0], sizes = [8, 32], strides = [1, 1]} : vector<32x32xbf16> to vector<8x32xbf16>
    %c2_38 = arith.constant 2 : index
    %c0_39 = arith.constant 0 : index
    %c0_40 = arith.constant 0 : index
    %67 = vector.load %arg5[%c2_38, %c0_39, %c0_40] : memref<4x32x128xbf16, #tpu.memory_space<vmem>>, vector<1x32x128xbf16>
    %68 = vector.shape_cast %67 : vector<1x32x128xbf16> to vector<32x128xbf16>
    %cst_41 = arith.constant dense<0.000000e+00> : vector<8x128xf32>
    %69 = tpu.matmul %66, %68, %cst_41 {dimension_numbers = #tpu.dot_dimension_numbers<[1], [0], [0], [1], [0, 0, 1, 1], [], []>} : vector<8x32xbf16>, vector<32x128xbf16>, vector<8x128xf32> -> vector<8x128xf32>
    %70 = arith.addf %65, %69 : vector<8x128xf32>
    %71 = vector.extract_strided_slice %56 {offsets = [24, 0], sizes = [8, 32], strides = [1, 1]} : vector<32x32xbf16> to vector<8x32xbf16>
    %c3_42 = arith.constant 3 : index
    %c0_43 = arith.constant 0 : index
    %c0_44 = arith.constant 0 : index
    %72 = vector.load %arg5[%c3_42, %c0_43, %c0_44] : memref<4x32x128xbf16, #tpu.memory_space<vmem>>, vector<1x32x128xbf16>
    %73 = vector.shape_cast %72 : vector<1x32x128xbf16> to vector<32x128xbf16>
    %cst_45 = arith.constant dense<0.000000e+00> : vector<8x128xf32>
    %74 = tpu.matmul %71, %73, %cst_45 {dimension_numbers = #tpu.dot_dimension_numbers<[1], [0], [0], [1], [0, 0, 1, 1], [], []>} : vector<8x32xbf16>, vector<32x128xbf16>, vector<8x128xf32> -> vector<8x128xf32>
    %75 = arith.addf %70, %74 : vector<8x128xf32>
    %c0_46 = arith.constant 0 : index
    %c0_47 = arith.constant 0 : index
    %76 = vector.load %arg8[%c0_46, %c0_47] : memref<1x128xf32, #tpu.memory_space<vmem>>, vector<1x128xf32>
    %77 = vector.broadcast %76 : vector<1x128xf32> to vector<8x128xf32>
    %78 = arith.addf %75, %77 : vector<8x128xf32>
    %79 = arith.truncf %78 : vector<8x128xf32> to vector<8x128xbf16>
    %c0_48 = arith.constant 0 : index
    %c0_49 = arith.constant 0 : index
    %c0_50 = arith.constant 0 : index
    %80 = vector.load %arg9[%c0_48, %c0_49, %c0_50] : memref<1x8x128xbf16, #tpu.memory_space<vmem>>, vector<1x8x128xbf16>
    %81 = vector.shape_cast %80 : vector<1x8x128xbf16> to vector<8x128xbf16>
    %82 = vector.shape_cast %79 : vector<8x128xbf16> to vector<1x8x128xbf16>
    tpu.vector_store %arg9[%c0_48, %c0_49, %c0_50], %82 {strides = array<i32>} : memref<1x8x128xbf16, #tpu.memory_space<vmem>>, vector<1x8x128xbf16>,
    return
  }
  func.func @transform_0(%arg0: i32, %arg1: i32) -> (i32, i32, i32, i32) {
    %c0_i32 = arith.constant 0 : i32
    %c0_i32_0 = arith.constant 0 : i32
    %c0_i32_1 = arith.constant 0 : i32
    return %arg0, %arg1, %c0_i32, %c0_i32_0 : i32, i32, i32, i32
  }
  func.func @transform_1(%arg0: i32, %arg1: i32) -> (i32, i32) {
    %c0_i32 = arith.constant 0 : i32
    %c0_i32_0 = arith.constant 0 : i32
    %c0_i32_1 = arith.constant 0 : i32
    return %c0_i32, %c0_i32_0 : i32, i32
  }
  func.func @transform_2(%arg0: i32, %arg1: i32) -> (i32, i32, i32) {
    %c0_i32 = arith.constant 0 : i32
    %c0_i32_0 = arith.constant 0 : i32
    %c0_i32_1 = arith.constant 0 : i32
    %c0_i32_2 = arith.constant 0 : i32
    return %c0_i32, %c0_i32_0, %c0_i32_1 : i32, i32, i32
  }
  func.func @transform_3(%arg0: i32, %arg1: i32) -> (i32, i32, i32) {
    %c0_i32 = arith.constant 0 : i32
    %c0_i32_0 = arith.constant 0 : i32
    %c0_i32_1 = arith.constant 0 : i32
    %c0_i32_2 = arith.constant 0 : i32
    return %c0_i32, %c0_i32_0, %c0_i32_1 : i32, i32, i32
  }
  func.func @transform_4(%arg0: i32, %arg1: i32) -> (i32, i32) {
    %c0_i32 = arith.constant 0 : i32
    %c0_i32_0 = arith.constant 0 : i32
    %c0_i32_1 = arith.constant 0 : i32
    return %c0_i32, %c0_i32_0 : i32, i32
  }
  func.func @transform_5(%arg0: i32, %arg1: i32) -> (i32, i32) {
    %c0_i32 = arith.constant 0 : i32
    %c0_i32_0 = arith.constant 0 : i32
    %c0_i32_1 = arith.constant 0 : i32
    return %c0_i32, %c0_i32_0 : i32, i32
  }
  func.func @transform_6(%arg0: i32, %arg1: i32) -> (i32, i32) {
    %c0_i32 = arith.constant 0 : i32
    %c0_i32_0 = arith.constant 0 : i32
    %c0_i32_1 = arith.constant 0 : i32
    return %c0_i32, %c0_i32_0 : i32, i32
  }
  func.func @transform_7(%arg0: i32, %arg1: i32) -> (i32, i32, i32) {
    %c0_i32 = arith.constant 0 : i32
    %c0_i32_0 = arith.constant 0 : i32
    return %arg0, %arg1, %c0_i32 : i32, i32, i32
  }
}

</mosaic_0001>

<llo_original>
// kernel: hmlp_stem_forward.1
$region0: #{hmlp_stem_forward.1}
  #allocation0 [shape = 'u32[]', space=smem, size = 0x4, offset = 0x4, fixed_abs, tag = 'smem constant byte address 0x4 - core index']
  #allocation1 [shape = 'u32[144,128]{1,0:T(1,128)}', space=vmem, size = 0x12000, scoped, tag = 'internal scratch']
  %s0 = inlined_call_operand.vmem [shape: bf16[2,2,128,48], index: 0, kind: input, shape index: {}]
  %s1 = inlined_call_operand.vmem [shape: bf16[48,32], index: 1, kind: input, shape index: {}]
  %s2 = inlined_call_operand.vmem [shape: bf16[4,32,32], index: 2, kind: input, shape index: {}]
  %s3 = inlined_call_operand.vmem [shape: bf16[4,32,128], index: 3, kind: input, shape index: {}]
  %s4 = inlined_call_operand.vmem [shape: f32[1,32], index: 4, kind: input, shape index: {}]
  %s5 = inlined_call_operand.vmem [shape: f32[1,32], index: 5, kind: input, shape index: {}]
  %s6 = inlined_call_operand.vmem [shape: f32[1,128], index: 6, kind: input, shape index: {}]
  %s7 = inlined_call_operand.hbm [shape: bf16[2,16,128], index: 7, kind: output, shape index: {}]
  %s8 = sld [smem:[#allocation0]]
  $region61: #{hmlp_stem_forward.1} parent=0
    _
  %s10 = ssub.s32 1, %s8
  %s11 = scalar_select 0, %s10, %s8
  $region1: #{hmlp_stem_forward.1} parent=0
    #allocation2 [shape = 'u8[4096]{0}', space=vmem, size = 0x1000, scoped, tag = 'output window, operand 0']
    #allocation3 [shape = 's32[2]{0}', space=sflag, size = 0x8, scoped, tag = 'scoped memory for hmlp_stem_forward.1']
    %12 = vsyncpa [#allocation3], 0
    %s13 = scalar_lea.sflag [#allocation3], 1
    %14 = vsyncpa %s13, 0
    loop: start=0, step=1, limit=6
    $region2: #{hmlp_stem_forward.1} parent=1 // loop_pre_header
      _
    $region3: #{hmlp_stem_forward.1} parent=1 // loop_header
      %s16 = sphi 0, %s20
      %p17 = scmp.ge.s32.totalorder %s16, 6
      %s23 = sphi 0, %s35
      %s24 = sphi 0, %s31
      %s25 = sphi 0, %s23
      %s26 = sphi 0, %s24
      %s27 = sphi 0, %s25
      %s28 = sphi 0, %s26
      %s40 = sphi 0, %s42
      %s43 = sphi 0, %s40
      %s44 = sphi 0, %s43
      %s60 = sphi 0, %s44
      %s64 = sphi 0, %s64
      %s66 = sphi 0, %s64
      %s67 = sphi 0, %s66
      %s81 = sphi 0, %s67
      %s85 = sphi 0, %s85
      %s87 = sphi 0, %s85
      %s88 = sphi 0, %s87
      %s102 = sphi 0, %s88
      %s106 = sphi 0, %s106
      %s108 = sphi 0, %s106
      %s109 = sphi 0, %s108
      %s123 = sphi 0, %s109
      %s127 = sphi 0, %s127
      %s129 = sphi 0, %s127
      %s130 = sphi 0, %s129
      %s144 = sphi 0, %s130
      %s148 = sphi 0, %s148
      %s150 = sphi 0, %s148
      %s151 = sphi 0, %s150
      %s165 = sphi 0, %s151
      %s169 = sphi 0, %s169
      %s171 = sphi 0, %s169
      %s172 = sphi 0, %s171
      %s186 = sphi 0, %s172
      %s194 = sphi 0, %s196
      %s197 = sphi 0, %s194
      %s198 = sphi 0, %s197
      %s214 = sphi 0, %s198
    $region4: #{hmlp_stem_forward.1} parent=1 // loop_header_branch
      %19 = sbr.rel (%p17) target = $region8
    $region5: #{hmlp_stem_forward.1} parent=1 // loop_body
      %s21 = ssub.s32 %s16, 1
      %s22 = ssub.s32 %s16, 2
      %s29 = sadd.s32 1, %s24
      %p30 = scmp.ge.s32.totalorder %s29, 2
      %s31 = scalar_select %p30, 0, %s29
      %s32 = sadd.s32 1, %s23
      %s33 = scalar_select %p30, %s32, %s23
      %p34 = scmp.ge.s32.totalorder %s33, 2
      %s35 = scalar_select %p34, 0, %s33
      %s36 = ssub.s32 %s23, %s35
      %s37 = ssub.s32 %s24, %s31
      %s38 = sor.u32 %s36, %s37
      %p39 = scmp.eq.s32.totalorder %s38, 0
      %s41 = sadd.s32 %s40, 1
      %s42 = scalar_select %p39, %s40, %s41
      %p45 = pneg %p39
      %p46 = scmp.eq.s32.totalorder %s16, 3
      %p47 = por %p45, %p46
      %p48 = scmp.ne.s32.totalorder %s40, %s43
      %p49 = scmp.eq.s32.totalorder %s16, 0
      %p50 = por %p48, %p49
      %p51 = scmp.ne.s32.totalorder %s40, %s43
      %p52 = scmp.eq.s32.totalorder %s21, 3
      %p53 = por %p51, %p52
      %p54 = scmp.ne.s32.totalorder %s43, %s44
      %p55 = scmp.eq.s32.totalorder %s21, 0
      %p56 = por %p54, %p55
      %p57 = scmp.ne.s32.totalorder %s43, %s44
      %p58 = scmp.eq.s32.totalorder %s22, 3
      %p59 = por %p57, %p58
      %p61 = scmp.ne.s32.totalorder %s44, %s60
      %p62 = scmp.eq.s32.totalorder %s22, 0
      %p63 = por %p61, %p62
      %s65 = sadd.s32 %s64, 1
      %p68 = scmp.eq.s32.totalorder %s16, 3
      %p69 = scmp.ne.s32.totalorder %s64, %s66
      %p70 = scmp.eq.s32.totalorder %s16, 0
      %p71 = por %p69, %p70
      %p72 = scmp.ne.s32.totalorder %s64, %s66
      %p73 = scmp.eq.s32.totalorder %s21, 3
      %p74 = por %p72, %p73
      %p75 = scmp.ne.s32.totalorder %s66, %s67
      %p76 = scmp.eq.s32.totalorder %s21, 0
      %p77 = por %p75, %p76
      %p78 = scmp.ne.s32.totalorder %s66, %s67
      %p79 = scmp.eq.s32.totalorder %s22, 3
      %p80 = por %p78, %p79
      %p82 = scmp.ne.s32.totalorder %s67, %s81
      %p83 = scmp.eq.s32.totalorder %s22, 0
      %p84 = por %p82, %p83
      %s86 = sadd.s32 %s85, 1
      %p89 = scmp.eq.s32.totalorder %s16, 3
      %p90 = scmp.ne.s32.totalorder %s85, %s87
      %p91 = scmp.eq.s32.totalorder %s16, 0
      %p92 = por %p90, %p91
      %p93 = scmp.ne.s32.totalorder %s85, %s87
      %p94 = scmp.eq.s32.totalorder %s21, 3
      %p95 = por %p93, %p94
      %p96 = scmp.ne.s32.totalorder %s87, %s88
      %p97 = scmp.eq.s32.totalorder %s21, 0
      %p98 = por %p96, %p97
      %p99 = scmp.ne.s32.totalorder %s87, %s88
      %p100 = scmp.eq.s32.totalorder %s22, 3
      %p101 = por %p99, %p100
      %p103 = scmp.ne.s32.totalorder %s88, %s102
      %p104 = scmp.eq.s32.totalorder %s22, 0
      %p105 = por %p103, %p104
      %s107 = sadd.s32 %s106, 1
      %p110 = scmp.eq.s32.totalorder %s16, 3
      %p111 = scmp.ne.s32.totalorder %s106, %s108
      %p112 = scmp.eq.s32.totalorder %s16, 0
      %p113 = por %p111, %p112
      %p114 = scmp.ne.s32.totalorder %s106, %s108
      %p115 = scmp.eq.s32.totalorder %s21, 3
      %p116 = por %p114, %p115
      %p117 = scmp.ne.s32.totalorder %s108, %s109
      %p118 = scmp.eq.s32.totalorder %s21, 0
      %p119 = por %p117, %p118
      %p120 = scmp.ne.s32.totalorder %s108, %s109
      %p121 = scmp.eq.s32.totalorder %s22, 3
      %p122 = por %p120, %p121
      %p124 = scmp.ne.s32.totalorder %s109, %s123
      %p125 = scmp.eq.s32.totalorder %s22, 0
      %p126 = por %p124, %p125
      %s128 = sadd.s32 %s127, 1
      %p131 = scmp.eq.s32.totalorder %s16, 3
      %p132 = scmp.ne.s32.totalorder %s127, %s129
      %p133 = scmp.eq.s32.totalorder %s16, 0
      %p134 = por %p132, %p133
      %p135 = scmp.ne.s32.totalorder %s127, %s129
      %p136 = scmp.eq.s32.totalorder %s21, 3
      %p137 = por %p135, %p136
      %p138 = scmp.ne.s32.totalorder %s129, %s130
      %p139 = scmp.eq.s32.totalorder %s21, 0
      %p140 = por %p138, %p139
      %p141 = scmp.ne.s32.totalorder %s129, %s130
      %p142 = scmp.eq.s32.totalorder %s22, 3
      %p143 = por %p141, %p142
      %p145 = scmp.ne.s32.totalorder %s130, %s144
      %p146 = scmp.eq.s32.totalorder %s22, 0
      %p147 = por %p145, %p146
      %s149 = sadd.s32 %s148, 1
      %p152 = scmp.eq.s32.totalorder %s16, 3
      %p153 = scmp.ne.s32.totalorder %s148, %s150
      %p154 = scmp.eq.s32.totalorder %s16, 0
      %p155 = por %p153, %p154
      %p156 = scmp.ne.s32.totalorder %s148, %s150
      %p157 = scmp.eq.s32.totalorder %s21, 3
      %p158 = por %p156, %p157
      %p159 = scmp.ne.s32.totalorder %s150, %s151
      %p160 = scmp.eq.s32.totalorder %s21, 0
      %p161 = por %p159, %p160
      %p162 = scmp.ne.s32.totalorder %s150, %s151
      %p163 = scmp.eq.s32.totalorder %s22, 3
      %p164 = por %p162, %p163
      %p166 = scmp.ne.s32.totalorder %s151, %s165
      %p167 = scmp.eq.s32.totalorder %s22, 0
      %p168 = por %p166, %p167
      %s170 = sadd.s32 %s169, 1
      %p173 = scmp.eq.s32.totalorder %s16, 3
      %p174 = scmp.ne.s32.totalorder %s169, %s171
      %p175 = scmp.eq.s32.totalorder %s16, 0
      %p176 = por %p174, %p175
      %p177 = scmp.ne.s32.totalorder %s169, %s171
      %p178 = scmp.eq.s32.totalorder %s21, 3
      %p179 = por %p177, %p178
      %p180 = scmp.ne.s32.totalorder %s171, %s172
      %p181 = scmp.eq.s32.totalorder %s21, 0
      %p182 = por %p180, %p181
      %p183 = scmp.ne.s32.totalorder %s171, %s172
      %p184 = scmp.eq.s32.totalorder %s22, 3
      %p185 = por %p183, %p184
      %p187 = scmp.ne.s32.totalorder %s172, %s186
      %p188 = scmp.eq.s32.totalorder %s22, 0
      %p189 = por %p187, %p188
      %s190 = ssub.s32 %s23, %s35
      %s191 = ssub.s32 %s24, %s31
      %s192 = sor.u32 %s190, %s191
      %p193 = scmp.eq.s32.totalorder %s192, 0
      %s195 = sadd.s32 %s194, 1
      %s196 = scalar_select %p193, %s194, %s195
      %p199 = pneg %p193
      %p200 = scmp.eq.s32.totalorder %s16, 3
      %p201 = por %p199, %p200
      %p202 = scmp.ne.s32.totalorder %s194, %s197
      %p203 = scmp.eq.s32.totalorder %s16, 0
      %p204 = por %p202, %p203
      %p205 = scmp.ne.s32.totalorder %s194, %s197
      %p206 = scmp.eq.s32.totalorder %s21, 3
      %p207 = por %p205, %p206
      %p208 = scmp.ne.s32.totalorder %s197, %s198
      %p209 = scmp.eq.s32.totalorder %s21, 0
      %p210 = por %p208, %p209
      %p211 = scmp.ne.s32.totalorder %s197, %s198
      %p212 = scmp.eq.s32.totalorder %s22, 3
      %p213 = por %p211, %p212
      %p215 = scmp.ne.s32.totalorder %s198, %s214
      %p216 = scmp.eq.s32.totalorder %s22, 0
      %p217 = por %p215, %p216
      %p218 = scmp.le.s32.totalorder 1, %s16
      %p219 = scmp.lt.s32.totalorder %s16, 5
      %p220 = pnand %p218, %p219
      %p221 = pneg %p220
      // Predicated region
      $region9: #{hmlp_stem_forward.1} parent=5 // pred_check
        _
      $region10: #{hmlp_stem_forward.1} parent=5 // pred_check_branch
        %223 = sbr.rel (%p220) target = $region12
      $region11: #{hmlp_stem_forward.1} parent=5 // pred_region
        %s224 = ssub.s32 %s16, 1
        // Predicated region
        $region13: #{hmlp_stem_forward.1} parent=11 // pred_check
          %p225 = pneg %p77
        $region14: #{hmlp_stem_forward.1} parent=11 // pred_check_branch
          %227 = sbr.rel (%p225) target = $region16
        $region15: #{hmlp_stem_forward.1} parent=11 // pred_region
          _
        $region16: #{hmlp_stem_forward.1} parent=11 // pred_fallthru
          _
        // Predicated region
        $region17: #{hmlp_stem_forward.1} parent=11 // pred_check
          %p228 = pneg %p98
        $region18: #{hmlp_stem_forward.1} parent=11 // pred_check_branch
          %230 = sbr.rel (%p228) target = $region20
        $region19: #{hmlp_stem_forward.1} parent=11 // pred_region
          _
        $region20: #{hmlp_stem_forward.1} parent=11 // pred_fallthru
          _
        // Predicated region
        $region21: #{hmlp_stem_forward.1} parent=11 // pred_check
          %p231 = pneg %p119
        $region22: #{hmlp_stem_forward.1} parent=11 // pred_check_branch
          %233 = sbr.rel (%p231) target = $region24
        $region23: #{hmlp_stem_forward.1} parent=11 // pred_region
          _
        $region24: #{hmlp_stem_forward.1} parent=11 // pred_fallthru
          _
        // Predicated region
        $region25: #{hmlp_stem_forward.1} parent=11 // pred_check
          %p234 = pneg %p140
        $region26: #{hmlp_stem_forward.1} parent=11 // pred_check_branch
          %236 = sbr.rel (%p234) target = $region28
        $region27: #{hmlp_stem_forward.1} parent=11 // pred_region
          _
        $region28: #{hmlp_stem_forward.1} parent=11 // pred_fallthru
          _
        // Predicated region
        $region29: #{hmlp_stem_forward.1} parent=11 // pred_check
          %p237 = pneg %p161
        $region30: #{hmlp_stem_forward.1} parent=11 // pred_check_branch
          %239 = sbr.rel (%p237) target = $region32
        $region31: #{hmlp_stem_forward.1} parent=11 // pred_region
          _
        $region32: #{hmlp_stem_forward.1} parent=11 // pred_fallthru
          _
        // Predicated region
        $region33: #{hmlp_stem_forward.1} parent=11 // pred_check
          %p240 = pneg %p182
        $region34: #{hmlp_stem_forward.1} parent=11 // pred_check_branch
          %242 = sbr.rel (%p240) target = $region36
        $region35: #{hmlp_stem_forward.1} parent=11 // pred_region
          _
        $region36: #{hmlp_stem_forward.1} parent=11 // pred_fallthru
          _
      $region12: #{hmlp_stem_forward.1} parent=5 // pred_fallthru
        _
      %p243 = scmp.lt.s32.totalorder %s16, 4
      // Predicated region
      $region37: #{hmlp_stem_forward.1} parent=5 // pred_check
        %p244 = pneg %p243
      $region38: #{hmlp_stem_forward.1} parent=5 // pred_check_branch
        %246 = sbr.rel (%p244) target = $region40
      $region39: #{hmlp_stem_forward.1} parent=5 // pred_region
        // Predicated region
        $region41: #{hmlp_stem_forward.1} parent=39 // pred_check
          %p247 = pneg %p50
        $region42: #{hmlp_stem_forward.1} parent=39 // pred_check_branch
          %249 = sbr.rel (%p247) target = $region44
        $region43: #{hmlp_stem_forward.1} parent=39 // pred_region
          %p250 = scmp.lt.s32.totalorder %s23, 1
          %s251 = scalar_select %p250, %s23, 1
          %p252 = scmp.lt.s32.totalorder %s24, 1
          %s253 = scalar_select %p252, %s24, 1
          %s254 = smul.addr %s253, 16
          %s255 = smul.addr %s251, 32
          %s256 = sadd.s32 %s254, %s255
          %s257 = smul.addr %s256, 4
          %s258 = scalar_lea.vmem %s0, %s257
        $region44: #{hmlp_stem_forward.1} parent=39 // pred_fallthru
          _
      $region40: #{hmlp_stem_forward.1} parent=5 // pred_fallthru
        _
      %p259 = scmp.le.s32.totalorder 1, %s16
      %p260 = scmp.lt.s32.totalorder %s16, 5
      %p261 = pnand %p259, %p260
      %p262 = pneg %p261
      // Predicated region
      $region45: #{hmlp_stem_forward.1} parent=5 // pred_check
        _
      $region46: #{hmlp_stem_forward.1} parent=5 // pred_check_branch
        %264 = sbr.rel (%p261) target = $region48
      $region47: #{hmlp_stem_forward.1} parent=5 // pred_region
        %s265 = ssub.s32 %s16, 1
        %p266 = scmp.lt.s32.totalorder %s25, 1
        %s267 = scalar_select %p266, %s25, 1
        %p268 = scmp.lt.s32.totalorder %s26, 1
        %s269 = scalar_select %p268, %s26, 1
        %s270 = smul.addr %s269, 16
        %s271 = smul.addr %s267, 32
        %s272 = sadd.s32 %s270, %s271
        %s273 = smul.addr %s272, 4
        %s274 = scalar_lea.vmem %s0, %s273
        %p275 = pneg %p56
        %p276 = pneg %p53
        %p277 = pneg %p77
        %p278 = pneg %p74
        %p279 = pneg %p98
        %p280 = pneg %p95
        %p281 = pneg %p119
        %p282 = pneg %p116
        %p283 = pneg %p140
        %p284 = pneg %p137
        %p285 = pneg %p161
        %p286 = pneg %p158
        %p287 = pneg %p182
        %p288 = pneg %p179
        %p289 = pneg %p210
        %p290 = pneg %p207
        %s291 = sand.u32 %s197, 1
        %s292 = scalar_lea.sflag [#allocation3], %s291
        %s293 = sand.u32 %s197, 1
        %s294 = smul.addr %s293, 4
        %s295 = scalar_lea.vmem [#allocation2], %s294
        %p296 = scmp.lt.s32.totalorder %s25, 1
        %s297 = scalar_select %p296, %s25, 1
        %p298 = scmp.lt.s32.totalorder %s26, 1
        %s299 = scalar_select %p298, %s26, 1
        %s300 = smul.addr %s299, 16
        %s301 = smul.addr %s297, 32
        %s302 = sadd.s32 %s300, %s301
        %s303 = smul.addr %s302, 4
        %s304 = scalar_lea.vmem %s0, %s303
        %v306 = vld [vmem:[%s304] sm:$0xf]
        %v307 = vld [vmem:[%s304 + $0x4] sm:$0xf]
        %v308 = vld [vmem:[%s304 + $0x8] sm:$0xf]
        %v309 = vld [vmem:[%s304 + $0xc] sm:$0xf]
        %v310 = vld [vmem:[%s304 + $0x10] sm:$0xf]
        %v311 = vld [vmem:[%s304 + $0x14] sm:$0xf]
        %v312 = vld [vmem:[%s304 + $0x18] sm:$0xf]
        %v313 = vld [vmem:[%s304 + $0x1c] sm:$0xf]
        %v314 = vld [vmem:[%s304 + $0x20] sm:$0xf]
        %v315 = vld [vmem:[%s304 + $0x24] sm:$0xf]
        %v316 = vld [vmem:[%s304 + $0x28] sm:$0xf]
        %v317 = vld [vmem:[%s304 + $0x2c] sm:$0xf]
        %v318 = vld [vmem:[%s304 + $0x30] sm:$0xf]
        %v319 = vld [vmem:[%s304 + $0x34] sm:$0xf]
        %v320 = vld [vmem:[%s304 + $0x38] sm:$0xf]
        %v321 = vld [vmem:[%s304 + $0x3c] sm:$0xf]
        %v322 = vld [vmem:[%s1] sm:$0xf]
        %v323 = vld [vmem:[%s1 + $0x4] sm:$0xf]
        %v324 = vld [vmem:[%s1 + $0x8] sm:$0xf]
        %v325 = vld [vmem:[%s1 + $0xc] sm:$0xf]
        %v326 = vld [vmem:[%s1 + $0x10] sm:$0xf]
        %v327 = vld [vmem:[%s1 + $0x14] sm:$0xf]
        %v328 = vld [vmem:[%s4] sm:$0x1]
        %v330 = vlaneseq
        %v331 = vshrl.u32 %v330, 7
        %v332 = vsub.s32 0, %v331
        %v333 = vrot.slane %v328, %v332
        %v351 = vunpack.c.l.b16 %v306
        %v352 = vunpack.c.l.b16 %v307
        %v353 = vunpack.c.l.b16 %v308
        %v354 = vunpack.c.l.b16 %v309
        %v355 = vunpack.c.l.b16 %v310
        %v356 = vunpack.c.l.b16 %v311
        %v357 = vunpack.c.l.b16 %v312
        %v358 = vunpack.c.l.b16 %v313
        %v359 = vunpack.c.l.b16 %v314
        %v360 = vunpack.c.l.b16 %v315
        %v361 = vunpack.c.l.b16 %v316
        %v362 = vunpack.c.l.b16 %v317
        %v363 = vunpack.c.l.b16 %v318
        %v364 = vunpack.c.l.b16 %v319
        %v365 = vunpack.c.l.b16 %v320
        %v366 = vunpack.c.l.b16 %v321
        %v367 = vpack.c.b16 %v352, %v351
        %v368 = vpack.c.b16 %v354, %v353
        %v369 = vpack.c.b16 %v356, %v355
        %v370 = vpack.c.b16 %v358, %v357
        %v371 = vpack.c.b16 %v360, %v359
        %v372 = vpack.c.b16 %v362, %v361
        %v373 = vpack.c.b16 %v364, %v363
        %v374 = vpack.c.b16 %v366, %v365
        %v381 = vunpack.c.l.b16 %v322
        %v382 = vunpack.c.l.b16 %v323
        %v383 = vunpack.c.l.b16 %v324
        %v384 = vunpack.c.l.b16 %v325
        %v385 = vunpack.c.l.b16 %v326
        %v386 = vunpack.c.l.b16 %v327
        %v387 = vpack.c.b16 %v382, %v381
        %v388 = vpack.c.b16 %v384, %v383
        %v389 = vpack.c.b16 %v386, %v385
        %vm393 = vcmask 392192
        %v395 = vsel %vm393, %v367, 0
        %v398 = vsel %vm393, %v368, 0
        %v401 = vsel %vm393, %v369, 0
        %v404 = vsel %vm393, %v370, 0
        %v407 = vsel %vm393, %v371, 0
        %v410 = vsel %vm393, %v372, 0
        %v413 = vsel %vm393, %v373, 0
        %v416 = vsel %vm393, %v374, 0
        %418 = vmatprep.subr.bf16.mxu0 0
        %419 = vmatpush1.bf16.msra.mxu0 %v387
        %420 = vmatprep.subr.bf16.mxu0 0
        %421 = vmatpush1.bf16.msra.mxu0 %v388
        %422 = vmatprep.subr.bf16.mxu0 0
        %423 = vmatpush1.bf16.msra.mxu0 %v389
        %424 = vmatprep.subr.bf16.mxu0 0
        %425 = vmatpush1.bf16.msra.mxu0 0
        %426 = vmatprep.subr.bf16.mxu0 0
        %427 = vmatpush1.bf16.msra.mxu0 0
        %428 = vmatprep.subr.bf16.mxu0 0
        %429 = vmatpush1.bf16.msra.mxu0 0
        %430 = vmatprep.subr.bf16.mxu0 0
        %431 = vmatpush1.bf16.msra.mxu0 0
        %432 = vmatprep.subr.bf16.mxu0 0
        %433 = vmatpush1.bf16.msra.mxu0 0
        %434 = vmatprep.subr.bf16.mxu0 0
        %435 = vmatpush1.bf16.msra.mxu0 0
        %436 = vmatprep.subr.bf16.mxu0 0
        %437 = vmatpush1.bf16.msra.mxu0 0
        %438 = vmatprep.subr.bf16.mxu0 0
        %439 = vmatpush1.bf16.msra.mxu0 0
        %440 = vmatprep.subr.bf16.mxu0 0
        %441 = vmatpush1.bf16.msra.mxu0 0
        %442 = vmatprep.subr.bf16.mxu0 0
        %443 = vmatpush1.bf16.msra.mxu0 0
        %444 = vmatprep.subr.bf16.mxu0 0
        %445 = vmatpush1.bf16.msra.mxu0 0
        %446 = vmatprep.subr.bf16.mxu0 0
        %447 = vmatpush1.bf16.msra.mxu0 0
        %448 = vmatprep.subr.bf16.mxu0 0
        %449 = vmatpush1.bf16.msra.mxu0 0
        %450 = vmatprep.mubr.bf16.mxu0 0
        %451 = vmatmul.mubr.bf16.gmra.mrb[0].mxu0 %v395
        %v452 = vpop.f32.mrb[0].mxu0
        %v453 = vadd.f32 %v333, %v452
        %v454 = vpop.f32.mrb[0].mxu0
        %v455 = vpop.f32.mrb[0].mxu0
        %v456 = vadd.f32 %v333, %v455
        %v457 = vpop.f32.mrb[0].mxu0
        %458 = vmatprep.mubr.bf16.mxu0 0
        %459 = vmatmul.mubr.bf16.gmra.mrb[0].mxu0 %v398
        %v460 = vpop.f32.mrb[0].mxu0
        %v461 = vadd.f32 %v333, %v460
        %v462 = vpop.f32.mrb[0].mxu0
        %v463 = vpop.f32.mrb[0].mxu0
        %v464 = vadd.f32 %v333, %v463
        %v465 = vpop.f32.mrb[0].mxu0
        %466 = vmatprep.mubr.bf16.mxu0 0
        %467 = vmatmul.mubr.bf16.gmra.mrb[0].mxu0 %v401
        %v468 = vpop.f32.mrb[0].mxu0
        %v469 = vadd.f32 %v333, %v468
        %v470 = vpop.f32.mrb[0].mxu0
        %v471 = vpop.f32.mrb[0].mxu0
        %v472 = vadd.f32 %v333, %v471
        %v473 = vpop.f32.mrb[0].mxu0
        %474 = vmatprep.mubr.bf16.mxu0 0
        %475 = vmatmul.mubr.bf16.gmra.mrb[0].mxu0 %v404
        %v476 = vpop.f32.mrb[0].mxu0
        %v477 = vadd.f32 %v333, %v476
        %v478 = vpop.f32.mrb[0].mxu0
        %v479 = vpop.f32.mrb[0].mxu0
        %v480 = vadd.f32 %v333, %v479
        %v481 = vpop.f32.mrb[0].mxu0
        %482 = vmatprep.mubr.bf16.mxu0 0
        %483 = vmatmul.mubr.bf16.gmra.mrb[0].mxu0 %v407
        %v484 = vpop.f32.mrb[0].mxu0
        %v485 = vadd.f32 %v333, %v484
        %v486 = vpop.f32.mrb[0].mxu0
        %v487 = vpop.f32.mrb[0].mxu0
        %v488 = vadd.f32 %v333, %v487
        %v489 = vpop.f32.mrb[0].mxu0
        %490 = vmatprep.mubr.bf16.mxu0 0
        %491 = vmatmul.mubr.bf16.gmra.mrb[0].mxu0 %v410
        %v492 = vpop.f32.mrb[0].mxu0
        %v493 = vadd.f32 %v333, %v492
        %v494 = vpop.f32.mrb[0].mxu0
        %v495 = vpop.f32.mrb[0].mxu0
        %v496 = vadd.f32 %v333, %v495
        %v497 = vpop.f32.mrb[0].mxu0
        %498 = vmatprep.mubr.bf16.mxu0 0
        %499 = vmatmul.mubr.bf16.gmra.mrb[0].mxu0 %v413
        %v500 = vpop.f32.mrb[0].mxu0
        %v501 = vadd.f32 %v333, %v500
        %v502 = vpop.f32.mrb[0].mxu0
        %v503 = vpop.f32.mrb[0].mxu0
        %v504 = vadd.f32 %v333, %v503
        %v505 = vpop.f32.mrb[0].mxu0
        %506 = vmatprep.mubr.bf16.mxu0 0
        %507 = vmatmul.mubr.bf16.gmra.mrb[0].mxu0 %v416
        %v508 = vpop.f32.mrb[0].mxu0
        %v509 = vadd.f32 %v333, %v508
        %v510 = vpop.f32.mrb[0].mxu0
        %v511 = vpop.f32.mrb[0].mxu0
        %v512 = vadd.f32 %v333, %v511
        %v513 = vpop.f32.mrb[0].mxu0
        %514 = vdwg.mxu0
        %v515 = vmul.f32 %v453, 0.5
        %v516 = vmul.f32 %v456, 0.5
        %v517 = vmul.f32 %v461, 0.5
        %v518 = vmul.f32 %v464, 0.5
        %v519 = vmul.f32 %v469, 0.5
        %v520 = vmul.f32 %v472, 0.5
        %v521 = vmul.f32 %v477, 0.5
        %v522 = vmul.f32 %v480, 0.5
        %v523 = vmul.f32 %v485, 0.5
        %v524 = vmul.f32 %v488, 0.5
        %v525 = vmul.f32 %v493, 0.5
        %v526 = vmul.f32 %v496, 0.5
        %v527 = vmul.f32 %v501, 0.5
        %v528 = vmul.f32 %v504, 0.5
        %v529 = vmul.f32 %v509, 0.5
        %v530 = vmul.f32 %v512, 0.5
        %v531 = vmul.f32 %v453, 0.044715
        %v532 = vmul.f32 %v456, 0.044715
        %v533 = vmul.f32 %v461, 0.044715
        %v534 = vmul.f32 %v464, 0.044715
        %v535 = vmul.f32 %v469, 0.044715
        %v536 = vmul.f32 %v472, 0.044715
        %v537 = vmul.f32 %v477, 0.044715
        %v538 = vmul.f32 %v480, 0.044715
        %v539 = vmul.f32 %v485, 0.044715
        %v540 = vmul.f32 %v488, 0.044715
        %v541 = vmul.f32 %v493, 0.044715
        %v542 = vmul.f32 %v496, 0.044715
        %v543 = vmul.f32 %v501, 0.044715
        %v544 = vmul.f32 %v504, 0.044715
        %v545 = vmul.f32 %v509, 0.044715
        %v546 = vmul.f32 %v512, 0.044715
        %v547 = vmul.f32 %v531, %v453
        %v548 = vmul.f32 %v532, %v456
        %v549 = vmul.f32 %v533, %v461
        %v550 = vmul.f32 %v534, %v464
        %v551 = vmul.f32 %v535, %v469
        %v552 = vmul.f32 %v536, %v472
        %v553 = vmul.f32 %v537, %v477
        %v554 = vmul.f32 %v538, %v480
        %v555 = vmul.f32 %v539, %v485
        %v556 = vmul.f32 %v540, %v488
        %v557 = vmul.f32 %v541, %v493
        %v558 = vmul.f32 %v542, %v496
        %v559 = vmul.f32 %v543, %v501
        %v560 = vmul.f32 %v544, %v504
        %v561 = vmul.f32 %v545, %v509
        %v562 = vmul.f32 %v546, %v512
        %v563 = vmul.f32 %v547, %v453
        %v564 = vmul.f32 %v548, %v456
        %v565 = vmul.f32 %v549, %v461
        %v566 = vmul.f32 %v550, %v464
        %v567 = vmul.f32 %v551, %v469
        %v568 = vmul.f32 %v552, %v472
        %v569 = vmul.f32 %v553, %v477
        %v570 = vmul.f32 %v554, %v480
        %v571 = vmul.f32 %v555, %v485
        %v572 = vmul.f32 %v556, %v488
        %v573 = vmul.f32 %v557, %v493
        %v574 = vmul.f32 %v558, %v496
        %v575 = vmul.f32 %v559, %v501
        %v576 = vmul.f32 %v560, %v504
        %v577 = vmul.f32 %v561, %v509
        %v578 = vmul.f32 %v562, %v512
        %v579 = vadd.f32 %v453, %v563
        %v580 = vadd.f32 %v456, %v564
        %v581 = vadd.f32 %v461, %v565
        %v582 = vadd.f32 %v464, %v566
        %v583 = vadd.f32 %v469, %v567
        %v584 = vadd.f32 %v472, %v568
        %v585 = vadd.f32 %v477, %v569
        %v586 = vadd.f32 %v480, %v570
        %v587 = vadd.f32 %v485, %v571
        %v588 = vadd.f32 %v488, %v572
        %v589 = vadd.f32 %v493, %v573
        %v590 = vadd.f32 %v496, %v574
        %v591 = vadd.f32 %v501, %v575
        %v592 = vadd.f32 %v504, %v576
        %v593 = vadd.f32 %v509, %v577
        %v594 = vadd.f32 %v512, %v578
        %v595 = vmul.f32 %v579, 0.7978846
        %v596 = vmul.f32 %v580, 0.7978846
        %v597 = vmul.f32 %v581, 0.7978846
        %v598 = vmul.f32 %v582, 0.7978846
        %v599 = vmul.f32 %v583, 0.7978846
        %v600 = vmul.f32 %v584, 0.7978846
        %v601 = vmul.f32 %v585, 0.7978846
        %v602 = vmul.f32 %v586, 0.7978846
        %v603 = vmul.f32 %v587, 0.7978846
        %v604 = vmul.f32 %v588, 0.7978846
        %v605 = vmul.f32 %v589, 0.7978846
        %v606 = vmul.f32 %v590, 0.7978846
        %v607 = vmul.f32 %v591, 0.7978846
        %v608 = vmul.f32 %v592, 0.7978846
        %v609 = vmul.f32 %v593, 0.7978846
        %v610 = vmul.f32 %v594, 0.7978846
        %v611 = vtanh.pop %v595
        %v612 = vtanh.pop %v596
        %v613 = vtanh.pop %v597
        %v614 = vtanh.pop %v598
        %v615 = vtanh.pop %v599
        %v616 = vtanh.pop %v600
        %v617 = vtanh.pop %v601
        %v618 = vtanh.pop %v602
        %v619 = vtanh.pop %v603
        %v620 = vtanh.pop %v604
        %v621 = vtanh.pop %v605
        %v622 = vtanh.pop %v606
        %v623 = vtanh.pop %v607
        %v624 = vtanh.pop %v608
        %v625 = vtanh.pop %v609
        %v626 = vtanh.pop %v610
        %v627 = vadd.f32 %v611, 1.0
        %v628 = vadd.f32 %v612, 1.0
        %v629 = vadd.f32 %v613, 1.0
        %v630 = vadd.f32 %v614, 1.0
        %v631 = vadd.f32 %v615, 1.0
        %v632 = vadd.f32 %v616, 1.0
        %v633 = vadd.f32 %v617, 1.0
        %v634 = vadd.f32 %v618, 1.0
        %v635 = vadd.f32 %v619, 1.0
        %v636 = vadd.f32 %v620, 1.0
        %v637 = vadd.f32 %v621, 1.0
        %v638 = vadd.f32 %v622, 1.0
        %v639 = vadd.f32 %v623, 1.0
        %v640 = vadd.f32 %v624, 1.0
        %v641 = vadd.f32 %v625, 1.0
        %v642 = vadd.f32 %v626, 1.0
        %v643 = vmul.f32 %v515, %v627
        %v644 = vmul.f32 %v516, %v628
        %v645 = vmul.f32 %v517, %v629
        %v646 = vmul.f32 %v518, %v630
        %v647 = vmul.f32 %v519, %v631
        %v648 = vmul.f32 %v520, %v632
        %v649 = vmul.f32 %v521, %v633
        %v650 = vmul.f32 %v522, %v634
        %v651 = vmul.f32 %v523, %v635
        %v652 = vmul.f32 %v524, %v636
        %v653 = vmul.f32 %v525, %v637
        %v654 = vmul.f32 %v526, %v638
        %v655 = vmul.f32 %v527, %v639
        %v656 = vmul.f32 %v528, %v640
        %v657 = vmul.f32 %v529, %v641
        %v658 = vmul.f32 %v530, %v642
        %v659 = vpack.c.bf16 %v644, %v643
        %v660 = vpack.c.bf16 %v646, %v645
        %v661 = vpack.c.bf16 %v648, %v647
        %v662 = vpack.c.bf16 %v650, %v649
        %v663 = vpack.c.bf16 %v652, %v651
        %v664 = vpack.c.bf16 %v654, %v653
        %v665 = vpack.c.bf16 %v656, %v655
        %v666 = vpack.c.bf16 %v658, %v657
        %v667 = vld [vmem:[%s2] sm:$0xf]
        %v668 = vld [vmem:[%s2 + $0x4] sm:$0xf]
        %v669 = vld [vmem:[%s2 + $0x8] sm:$0xf]
        %v670 = vld [vmem:[%s2 + $0xc] sm:$0xf]
        %s671 = scalar_lea.vmem %s2, 16
        %v672 = vld [vmem:[%s671] sm:$0xf]
        %v673 = vld [vmem:[%s671 + $0x4] sm:$0xf]
        %v674 = vld [vmem:[%s671 + $0x8] sm:$0xf]
        %v675 = vld [vmem:[%s671 + $0xc] sm:$0xf]
        %v680 = vunpack.c.l.b16 %v672
        %v681 = vunpack.c.l.b16 %v673
        %v682 = vunpack.c.l.b16 %v674
        %v683 = vunpack.c.l.b16 %v675
        %v684 = vpack.c.b16 %v681, %v680
        %v685 = vpack.c.b16 %v683, %v682
        %vm688 = vcmask 261120
        %v690 = vsel %vm688, %v661, 0
        %v693 = vsel %vm688, %v662, 0
        %695 = vmatprep.subr.bf16.mxu0 0
        %696 = vmatpush1.bf16.msra.mxu0 %v684
        %697 = vmatprep.subr.bf16.mxu0 0
        %698 = vmatpush1.bf16.msra.mxu0 %v685
        %699 = vmatprep.subr.bf16.mxu0 0
        %700 = vmatpush1.bf16.msra.mxu0 0
        %701 = vmatprep.subr.bf16.mxu0 0
        %702 = vmatpush1.bf16.msra.mxu0 0
        %703 = vmatprep.subr.bf16.mxu0 0
        %704 = vmatpush1.bf16.msra.mxu0 0
        %705 = vmatprep.subr.bf16.mxu0 0
        %706 = vmatpush1.bf16.msra.mxu0 0
        %707 = vmatprep.subr.bf16.mxu0 0
        %708 = vmatpush1.bf16.msra.mxu0 0
        %709 = vmatprep.subr.bf16.mxu0 0
        %710 = vmatpush1.bf16.msra.mxu0 0
        %711 = vmatprep.subr.bf16.mxu0 0
        %712 = vmatpush1.bf16.msra.mxu0 0
        %713 = vmatprep.subr.bf16.mxu0 0
        %714 = vmatpush1.bf16.msra.mxu0 0
        %715 = vmatprep.subr.bf16.mxu0 0
        %716 = vmatpush1.bf16.msra.mxu0 0
        %717 = vmatprep.subr.bf16.mxu0 0
        %718 = vmatpush1.bf16.msra.mxu0 0
        %719 = vmatprep.subr.bf16.mxu0 0
        %720 = vmatpush1.bf16.msra.mxu0 0
        %721 = vmatprep.subr.bf16.mxu0 0
        %722 = vmatpush1.bf16.msra.mxu0 0
        %723 = vmatprep.subr.bf16.mxu0 0
        %724 = vmatpush1.bf16.msra.mxu0 0
        %725 = vmatprep.subr.bf16.mxu0 0
        %726 = vmatpush1.bf16.msra.mxu0 0
        %727 = vmatprep.mubr.bf16.mxu0 0
        %728 = vmatmul.mubr.bf16.gmra.mrb[0].mxu0 %v690
        %v729 = vpop.f32.mrb[0].mxu0
        %v730 = vadd.f32 0.0, %v729
        %v731 = vpop.f32.mrb[0].mxu0
        %v732 = vpop.f32.mrb[0].mxu0
        %v733 = vadd.f32 0.0, %v732
        %v734 = vpop.f32.mrb[0].mxu0
        %735 = vmatprep.mubr.bf16.mxu0 0
        %736 = vmatmul.mubr.bf16.gmra.mrb[0].mxu0 %v693
        %v737 = vpop.f32.mrb[0].mxu0
        %v738 = vadd.f32 0.0, %v737
        %v739 = vpop.f32.mrb[0].mxu0
        %v740 = vpop.f32.mrb[0].mxu0
        %v741 = vadd.f32 0.0, %v740
        %v742 = vpop.f32.mrb[0].mxu0
        %743 = vdwg.mxu0
        %v748 = vunpack.c.l.b16 %v667
        %v749 = vunpack.c.l.b16 %v668
        %v750 = vunpack.c.l.b16 %v669
        %v751 = vunpack.c.l.b16 %v670
        %v752 = vpack.c.b16 %v749, %v748
        %v753 = vpack.c.b16 %v751, %v750
        %v757 = vsel %vm688, %v659, 0
        %v760 = vsel %vm688, %v660, 0
        %762 = vmatprep.subr.bf16.mxu0 0
        %763 = vmatpush1.bf16.msra.mxu0 %v752
        %764 = vmatprep.subr.bf16.mxu0 0
        %765 = vmatpush1.bf16.msra.mxu0 %v753
        %766 = vmatprep.subr.bf16.mxu0 0
        %767 = vmatpush1.bf16.msra.mxu0 0
        %768 = vmatprep.subr.bf16.mxu0 0
        %769 = vmatpush1.bf16.msra.mxu0 0
        %770 = vmatprep.subr.bf16.mxu0 0
        %771 = vmatpush1.bf16.msra.mxu0 0
        %772 = vmatprep.subr.bf16.mxu0 0
        %773 = vmatpush1.bf16.msra.mxu0 0
        %774 = vmatprep.subr.bf16.mxu0 0
        %775 = vmatpush1.bf16.msra.mxu0 0
        %776 = vmatprep.subr.bf16.mxu0 0
        %777 = vmatpush1.bf16.msra.mxu0 0
        %778 = vmatprep.subr.bf16.mxu0 0
        %779 = vmatpush1.bf16.msra.mxu0 0
        %780 = vmatprep.subr.bf16.mxu0 0
        %781 = vmatpush1.bf16.msra.mxu0 0
        %782 = vmatprep.subr.bf16.mxu0 0
        %783 = vmatpush1.bf16.msra.mxu0 0
        %784 = vmatprep.subr.bf16.mxu0 0
        %785 = vmatpush1.bf16.msra.mxu0 0
        %786 = vmatprep.subr.bf16.mxu0 0
        %787 = vmatpush1.bf16.msra.mxu0 0
        %788 = vmatprep.subr.bf16.mxu0 0
        %789 = vmatpush1.bf16.msra.mxu0 0
        %790 = vmatprep.subr.bf16.mxu0 0
        %791 = vmatpush1.bf16.msra.mxu0 0
        %792 = vmatprep.subr.bf16.mxu0 0
        %793 = vmatpush1.bf16.msra.mxu0 0
        %794 = vmatprep.mubr.bf16.mxu0 0
        %795 = vmatmul.mubr.bf16.gmra.mrb[0].mxu0 %v757
        %v796 = vpop.f32.mrb[0].mxu0
        %v797 = vadd.f32 %v730, %v796
        %v798 = vpop.f32.mrb[0].mxu0
        %v799 = vpop.f32.mrb[0].mxu0
        %v800 = vadd.f32 %v733, %v799
        %v801 = vpop.f32.mrb[0].mxu0
        %802 = vmatprep.mubr.bf16.mxu0 0
        %803 = vmatmul.mubr.bf16.gmra.mrb[0].mxu0 %v760
        %v804 = vpop.f32.mrb[0].mxu0
        %v805 = vadd.f32 %v738, %v804
        %v806 = vpop.f32.mrb[0].mxu0
        %v807 = vpop.f32.mrb[0].mxu0
        %v808 = vadd.f32 %v741, %v807
        %v809 = vpop.f32.mrb[0].mxu0
        %810 = vdwg.mxu0
        %s811 = scalar_lea.vmem %s2, 32
        %v812 = vld [vmem:[%s811] sm:$0xf]
        %v813 = vld [vmem:[%s811 + $0x4] sm:$0xf]
        %v814 = vld [vmem:[%s811 + $0x8] sm:$0xf]
        %v815 = vld [vmem:[%s811 + $0xc] sm:$0xf]
        %v820 = vunpack.c.l.b16 %v812
        %v821 = vunpack.c.l.b16 %v813
        %v822 = vunpack.c.l.b16 %v814
        %v823 = vunpack.c.l.b16 %v815
        %v824 = vpack.c.b16 %v821, %v820
        %v825 = vpack.c.b16 %v823, %v822
        %v829 = vsel %vm688, %v663, 0
        %v832 = vsel %vm688, %v664, 0
        %834 = vmatprep.subr.bf16.mxu0 0
        %835 = vmatpush1.bf16.msra.mxu0 %v824
        %836 = vmatprep.subr.bf16.mxu0 0
        %837 = vmatpush1.bf16.msra.mxu0 %v825
        %838 = vmatprep.subr.bf16.mxu0 0
        %839 = vmatpush1.bf16.msra.mxu0 0
        %840 = vmatprep.subr.bf16.mxu0 0
        %841 = vmatpush1.bf16.msra.mxu0 0
        %842 = vmatprep.subr.bf16.mxu0 0
        %843 = vmatpush1.bf16.msra.mxu0 0
        %844 = vmatprep.subr.bf16.mxu0 0
        %845 = vmatpush1.bf16.msra.mxu0 0
        %846 = vmatprep.subr.bf16.mxu0 0
        %847 = vmatpush1.bf16.msra.mxu0 0
        %848 = vmatprep.subr.bf16.mxu0 0
        %849 = vmatpush1.bf16.msra.mxu0 0
        %850 = vmatprep.subr.bf16.mxu0 0
        %851 = vmatpush1.bf16.msra.mxu0 0
        %852 = vmatprep.subr.bf16.mxu0 0
        %853 = vmatpush1.bf16.msra.mxu0 0
        %854 = vmatprep.subr.bf16.mxu0 0
        %855 = vmatpush1.bf16.msra.mxu0 0
        %856 = vmatprep.subr.bf16.mxu0 0
        %857 = vmatpush1.bf16.msra.mxu0 0
        %858 = vmatprep.subr.bf16.mxu0 0
        %859 = vmatpush1.bf16.msra.mxu0 0
        %860 = vmatprep.subr.bf16.mxu0 0
        %861 = vmatpush1.bf16.msra.mxu0 0
        %862 = vmatprep.subr.bf16.mxu0 0
        %863 = vmatpush1.bf16.msra.mxu0 0
        %864 = vmatprep.subr.bf16.mxu0 0
        %865 = vmatpush1.bf16.msra.mxu0 0
        %866 = vmatprep.mubr.bf16.mxu0 0
        %867 = vmatmul.mubr.bf16.gmra.mrb[0].mxu0 %v829
        %v868 = vpop.f32.mrb[0].mxu0
        %v869 = vadd.f32 0.0, %v868
        %v870 = vpop.f32.mrb[0].mxu0
        %v871 = vpop.f32.mrb[0].mxu0
        %v872 = vadd.f32 0.0, %v871
        %v873 = vpop.f32.mrb[0].mxu0
        %874 = vmatprep.mubr.bf16.mxu0 0
        %875 = vmatmul.mubr.bf16.gmra.mrb[0].mxu0 %v832
        %v876 = vpop.f32.mrb[0].mxu0
        %v877 = vadd.f32 0.0, %v876
        %v878 = vpop.f32.mrb[0].mxu0
        %v879 = vpop.f32.mrb[0].mxu0
        %v880 = vadd.f32 0.0, %v879
        %v881 = vpop.f32.mrb[0].mxu0
        %882 = vdwg.mxu0
        %v883 = vadd.f32 %v797, %v869
        %v884 = vadd.f32 %v800, %v872
        %v885 = vadd.f32 %v805, %v877
        %v886 = vadd.f32 %v808, %v880
        %s887 = scalar_lea.vmem %s2, 48
        %v888 = vld [vmem:[%s887] sm:$0xf]
        %v889 = vld [vmem:[%s887 + $0x4] sm:$0xf]
        %v890 = vld [vmem:[%s887 + $0x8] sm:$0xf]
        %v891 = vld [vmem:[%s887 + $0xc] sm:$0xf]
        %v896 = vunpack.c.l.b16 %v888
        %v897 = vunpack.c.l.b16 %v889
        %v898 = vunpack.c.l.b16 %v890
        %v899 = vunpack.c.l.b16 %v891
        %v900 = vpack.c.b16 %v897, %v896
        %v901 = vpack.c.b16 %v899, %v898
        %v905 = vsel %vm688, %v665, 0
        %v908 = vsel %vm688, %v666, 0
        %910 = vmatprep.subr.bf16.mxu0 0
        %911 = vmatpush1.bf16.msra.mxu0 %v900
        %912 = vmatprep.subr.bf16.mxu0 0
        %913 = vmatpush1.bf16.msra.mxu0 %v901
        %914 = vmatprep.subr.bf16.mxu0 0
        %915 = vmatpush1.bf16.msra.mxu0 0
        %916 = vmatprep.subr.bf16.mxu0 0
        %917 = vmatpush1.bf16.msra.mxu0 0
        %918 = vmatprep.subr.bf16.mxu0 0
        %919 = vmatpush1.bf16.msra.mxu0 0
        %920 = vmatprep.subr.bf16.mxu0 0
        %921 = vmatpush1.bf16.msra.mxu0 0
        %922 = vmatprep.subr.bf16.mxu0 0
        %923 = vmatpush1.bf16.msra.mxu0 0
        %924 = vmatprep.subr.bf16.mxu0 0
        %925 = vmatpush1.bf16.msra.mxu0 0
        %926 = vmatprep.subr.bf16.mxu0 0
        %927 = vmatpush1.bf16.msra.mxu0 0
        %928 = vmatprep.subr.bf16.mxu0 0
        %929 = vmatpush1.bf16.msra.mxu0 0
        %930 = vmatprep.subr.bf16.mxu0 0
        %931 = vmatpush1.bf16.msra.mxu0 0
        %932 = vmatprep.subr.bf16.mxu0 0
        %933 = vmatpush1.bf16.msra.mxu0 0
        %934 = vmatprep.subr.bf16.mxu0 0
        %935 = vmatpush1.bf16.msra.mxu0 0
        %936 = vmatprep.subr.bf16.mxu0 0
        %937 = vmatpush1.bf16.msra.mxu0 0
        %938 = vmatprep.subr.bf16.mxu0 0
        %939 = vmatpush1.bf16.msra.mxu0 0
        %940 = vmatprep.subr.bf16.mxu0 0
        %941 = vmatpush1.bf16.msra.mxu0 0
        %942 = vmatprep.mubr.bf16.mxu0 0
        %943 = vmatmul.mubr.bf16.gmra.mrb[0].mxu0 %v905
        %v944 = vpop.f32.mrb[0].mxu0
        %v945 = vadd.f32 0.0, %v944
        %v946 = vpop.f32.mrb[0].mxu0
        %v947 = vpop.f32.mrb[0].mxu0
        %v948 = vadd.f32 0.0, %v947
        %v949 = vpop.f32.mrb[0].mxu0
        %950 = vmatprep.mubr.bf16.mxu0 0
        %951 = vmatmul.mubr.bf16.gmra.mrb[0].mxu0 %v908
        %v952 = vpop.f32.mrb[0].mxu0
        %v953 = vadd.f32 0.0, %v952
        %v954 = vpop.f32.mrb[0].mxu0
        %v955 = vpop.f32.mrb[0].mxu0
        %v956 = vadd.f32 0.0, %v955
        %v957 = vpop.f32.mrb[0].mxu0
        %958 = vdwg.mxu0
        %v959 = vadd.f32 %v883, %v945
        %v960 = vadd.f32 %v884, %v948
        %v961 = vadd.f32 %v885, %v953
        %v962 = vadd.f32 %v886, %v956
        %v963 = vld [vmem:[%s5] sm:$0x1]
        %v965 = vlaneseq
        %v966 = vshrl.u32 %v965, 7
        %v967 = vsub.s32 0, %v966
        %v968 = vrot.slane %v963, %v967
        %v970 = vadd.f32 %v959, %v968
        %v971 = vadd.f32 %v960, %v968
        %v972 = vadd.f32 %v961, %v968
        %v973 = vadd.f32 %v962, %v968
        %v974 = vmul.f32 %v970, 0.5
        %v975 = vmul.f32 %v971, 0.5
        %v976 = vmul.f32 %v972, 0.5
        %v977 = vmul.f32 %v973, 0.5
        %v978 = vmul.f32 %v970, 0.044715
        %v979 = vmul.f32 %v971, 0.044715
        %v980 = vmul.f32 %v972, 0.044715
        %v981 = vmul.f32 %v973, 0.044715
        %v982 = vmul.f32 %v978, %v970
        %v983 = vmul.f32 %v979, %v971
        %v984 = vmul.f32 %v980, %v972
        %v985 = vmul.f32 %v981, %v973
        %v986 = vmul.f32 %v982, %v970
        %v987 = vmul.f32 %v983, %v971
        %v988 = vmul.f32 %v984, %v972
        %v989 = vmul.f32 %v985, %v973
        %v990 = vadd.f32 %v970, %v986
        %v991 = vadd.f32 %v971, %v987
        %v992 = vadd.f32 %v972, %v988
        %v993 = vadd.f32 %v973, %v989
        %v994 = vmul.f32 %v990, 0.7978846
        %v995 = vmul.f32 %v991, 0.7978846
        %v996 = vmul.f32 %v992, 0.7978846
        %v997 = vmul.f32 %v993, 0.7978846
        %v998 = vtanh.pop %v994
        %v999 = vtanh.pop %v995
        %v1000 = vtanh.pop %v996
        %v1001 = vtanh.pop %v997
        %v1002 = vadd.f32 %v998, 1.0
        %v1003 = vadd.f32 %v999, 1.0
        %v1004 = vadd.f32 %v1000, 1.0
        %v1005 = vadd.f32 %v1001, 1.0
        %v1006 = vmul.f32 %v974, %v1002
        %v1007 = vmul.f32 %v975, %v1003
        %v1008 = vmul.f32 %v976, %v1004
        %v1009 = vmul.f32 %v977, %v1005
        %v1010 = vpack.c.bf16 %v1007, %v1006
        %v1011 = vpack.c.bf16 %v1009, %v1008
        %v1012 = vld [vmem:[%s3] sm:$0xf]
        %v1013 = vld [vmem:[%s3 + $0x4] sm:$0xf]
        %v1014 = vld [vmem:[%s3 + $0x8] sm:$0xf]
        %v1015 = vld [vmem:[%s3 + $0xc] sm:$0xf]
        %s1016 = scalar_lea.vmem %s3, 16
        %v1017 = vld [vmem:[%s1016] sm:$0xf]
        %v1018 = vld [vmem:[%s1016 + $0x4] sm:$0xf]
        %v1019 = vld [vmem:[%s1016 + $0x8] sm:$0xf]
        %v1020 = vld [vmem:[%s1016 + $0xc] sm:$0xf]
        %v1022 = vrot.slane %v1010, 4
        %v1027 = vunpack.c.l.b16 %v1017
        %v1028 = vunpack.c.l.b16 %v1018
        %v1029 = vunpack.c.l.b16 %v1019
        %v1030 = vunpack.c.l.b16 %v1020
        %v1031 = vpack.c.b16 %v1028, %v1027
        %v1032 = vpack.c.b16 %v1030, %v1029
        %v1036 = vsel %vm688, %v1022, 0
        %1038 = vmatprep.subr.bf16.mxu0 0
        %1039 = vmatpush1.bf16.msra.mxu0 %v1031
        %1040 = vmatprep.subr.bf16.mxu0 0
        %1041 = vmatpush1.bf16.msra.mxu0 %v1032
        %1042 = vmatprep.subr.bf16.mxu0 0
        %1043 = vmatpush1.bf16.msra.mxu0 0
        %1044 = vmatprep.subr.bf16.mxu0 0
        %1045 = vmatpush1.bf16.msra.mxu0 0
        %1046 = vmatprep.subr.bf16.mxu0 0
        %1047 = vmatpush1.bf16.msra.mxu0 0
        %1048 = vmatprep.subr.bf16.mxu0 0
        %1049 = vmatpush1.bf16.msra.mxu0 0
        %1050 = vmatprep.subr.bf16.mxu0 0
        %1051 = vmatpush1.bf16.msra.mxu0 0
        %1052 = vmatprep.subr.bf16.mxu0 0
        %1053 = vmatpush1.bf16.msra.mxu0 0
        %1054 = vmatprep.subr.bf16.mxu0 0
        %1055 = vmatpush1.bf16.msra.mxu0 0
        %1056 = vmatprep.subr.bf16.mxu0 0
        %1057 = vmatpush1.bf16.msra.mxu0 0
        %1058 = vmatprep.subr.bf16.mxu0 0
        %1059 = vmatpush1.bf16.msra.mxu0 0
        %1060 = vmatprep.subr.bf16.mxu0 0
        %1061 = vmatpush1.bf16.msra.mxu0 0
        %1062 = vmatprep.subr.bf16.mxu0 0
        %1063 = vmatpush1.bf16.msra.mxu0 0
        %1064 = vmatprep.subr.bf16.mxu0 0
        %1065 = vmatpush1.bf16.msra.mxu0 0
        %1066 = vmatprep.subr.bf16.mxu0 0
        %1067 = vmatpush1.bf16.msra.mxu0 0
        %1068 = vmatprep.subr.bf16.mxu0 0
        %1069 = vmatpush1.bf16.msra.mxu0 0
        %1070 = vmatprep.mubr.bf16.mxu0 0
        %1071 = vmatmul.mubr.bf16.gmra.mrb[0].mxu0 %v1036
        %v1072 = vpop.f32.mrb[0].mxu0
        %v1073 = vadd.f32 0.0, %v1072
        %v1074 = vpop.f32.mrb[0].mxu0
        %v1075 = vpop.f32.mrb[0].mxu0
        %v1076 = vpop.f32.mrb[0].mxu0
        %1077 = vdwg.mxu0
        %v1082 = vunpack.c.l.b16 %v1012
        %v1083 = vunpack.c.l.b16 %v1013
        %v1084 = vunpack.c.l.b16 %v1014
        %v1085 = vunpack.c.l.b16 %v1015
        %v1086 = vpack.c.b16 %v1083, %v1082
        %v1087 = vpack.c.b16 %v1085, %v1084
        %v1091 = vsel %vm688, %v1010, 0
        %1093 = vmatprep.subr.bf16.mxu0 0
        %1094 = vmatpush1.bf16.msra.mxu0 %v1086
        %1095 = vmatprep.subr.bf16.mxu0 0
        %1096 = vmatpush1.bf16.msra.mxu0 %v1087
        %1097 = vmatprep.subr.bf16.mxu0 0
        %1098 = vmatpush1.bf16.msra.mxu0 0
        %1099 = vmatprep.subr.bf16.mxu0 0
        %1100 = vmatpush1.bf16.msra.mxu0 0
        %1101 = vmatprep.subr.bf16.mxu0 0
        %1102 = vmatpush1.bf16.msra.mxu0 0
        %1103 = vmatprep.subr.bf16.mxu0 0
        %1104 = vmatpush1.bf16.msra.mxu0 0
        %1105 = vmatprep.subr.bf16.mxu0 0
        %1106 = vmatpush1.bf16.msra.mxu0 0
        %1107 = vmatprep.subr.bf16.mxu0 0
        %1108 = vmatpush1.bf16.msra.mxu0 0
        %1109 = vmatprep.subr.bf16.mxu0 0
        %1110 = vmatpush1.bf16.msra.mxu0 0
        %1111 = vmatprep.subr.bf16.mxu0 0
        %1112 = vmatpush1.bf16.msra.mxu0 0
        %1113 = vmatprep.subr.bf16.mxu0 0
        %1114 = vmatpush1.bf16.msra.mxu0 0
        %1115 = vmatprep.subr.bf16.mxu0 0
        %1116 = vmatpush1.bf16.msra.mxu0 0
        %1117 = vmatprep.subr.bf16.mxu0 0
        %1118 = vmatpush1.bf16.msra.mxu0 0
        %1119 = vmatprep.subr.bf16.mxu0 0
        %1120 = vmatpush1.bf16.msra.mxu0 0
        %1121 = vmatprep.subr.bf16.mxu0 0
        %1122 = vmatpush1.bf16.msra.mxu0 0
        %1123 = vmatprep.subr.bf16.mxu0 0
        %1124 = vmatpush1.bf16.msra.mxu0 0
        %1125 = vmatprep.mubr.bf16.mxu0 0
        %1126 = vmatmul.mubr.bf16.gmra.mrb[0].mxu0 %v1091
        %v1127 = vpop.f32.mrb[0].mxu0
        %v1128 = vadd.f32 %v1073, %v1127
        %v1129 = vpop.f32.mrb[0].mxu0
        %v1130 = vpop.f32.mrb[0].mxu0
        %v1131 = vpop.f32.mrb[0].mxu0
        %1132 = vdwg.mxu0
        %s1133 = scalar_lea.vmem %s3, 32
        %v1134 = vld [vmem:[%s1133] sm:$0xf]
        %v1135 = vld [vmem:[%s1133 + $0x4] sm:$0xf]
        %v1136 = vld [vmem:[%s1133 + $0x8] sm:$0xf]
        %v1137 = vld [vmem:[%s1133 + $0xc] sm:$0xf]
        %v1142 = vunpack.c.l.b16 %v1134
        %v1143 = vunpack.c.l.b16 %v1135
        %v1144 = vunpack.c.l.b16 %v1136
        %v1145 = vunpack.c.l.b16 %v1137
        %v1146 = vpack.c.b16 %v1143, %v1142
        %v1147 = vpack.c.b16 %v1145, %v1144
        %v1151 = vsel %vm688, %v1011, 0
        %1153 = vmatprep.subr.bf16.mxu0 0
        %1154 = vmatpush1.bf16.msra.mxu0 %v1146
        %1155 = vmatprep.subr.bf16.mxu0 0
        %1156 = vmatpush1.bf16.msra.mxu0 %v1147
        %1157 = vmatprep.subr.bf16.mxu0 0
        %1158 = vmatpush1.bf16.msra.mxu0 0
        %1159 = vmatprep.subr.bf16.mxu0 0
        %1160 = vmatpush1.bf16.msra.mxu0 0
        %1161 = vmatprep.subr.bf16.mxu0 0
        %1162 = vmatpush1.bf16.msra.mxu0 0
        %1163 = vmatprep.subr.bf16.mxu0 0
        %1164 = vmatpush1.bf16.msra.mxu0 0
        %1165 = vmatprep.subr.bf16.mxu0 0
        %1166 = vmatpush1.bf16.msra.mxu0 0
        %1167 = vmatprep.subr.bf16.mxu0 0
        %1168 = vmatpush1.bf16.msra.mxu0 0
        %1169 = vmatprep.subr.bf16.mxu0 0
        %1170 = vmatpush1.bf16.msra.mxu0 0
        %1171 = vmatprep.subr.bf16.mxu0 0
        %1172 = vmatpush1.bf16.msra.mxu0 0
        %1173 = vmatprep.subr.bf16.mxu0 0
        %1174 = vmatpush1.bf16.msra.mxu0 0
        %1175 = vmatprep.subr.bf16.mxu0 0
        %1176 = vmatpush1.bf16.msra.mxu0 0
        %1177 = vmatprep.subr.bf16.mxu0 0
        %1178 = vmatpush1.bf16.msra.mxu0 0
        %1179 = vmatprep.subr.bf16.mxu0 0
        %1180 = vmatpush1.bf16.msra.mxu0 0
        %1181 = vmatprep.subr.bf16.mxu0 0
        %1182 = vmatpush1.bf16.msra.mxu0 0
        %1183 = vmatprep.subr.bf16.mxu0 0
        %1184 = vmatpush1.bf16.msra.mxu0 0
        %1185 = vmatprep.mubr.bf16.mxu0 0
        %1186 = vmatmul.mubr.bf16.gmra.mrb[0].mxu0 %v1151
        %v1187 = vpop.f32.mrb[0].mxu0
        %v1188 = vadd.f32 0.0, %v1187
        %v1189 = vpop.f32.mrb[0].mxu0
        %v1190 = vpop.f32.mrb[0].mxu0
        %v1191 = vpop.f32.mrb[0].mxu0
        %1192 = vdwg.mxu0
        %v1193 = vadd.f32 %v1128, %v1188
        %s1194 = scalar_lea.vmem %s3, 48
        %v1195 = vld [vmem:[%s1194] sm:$0xf]
        %v1196 = vld [vmem:[%s1194 + $0x4] sm:$0xf]
        %v1197 = vld [vmem:[%s1194 + $0x8] sm:$0xf]
        %v1198 = vld [vmem:[%s1194 + $0xc] sm:$0xf]
        %v1200 = vrot.slane %v1011, 4
        %v1205 = vunpack.c.l.b16 %v1195
        %v1206 = vunpack.c.l.b16 %v1196
        %v1207 = vunpack.c.l.b16 %v1197
        %v1208 = vunpack.c.l.b16 %v1198
        %v1209 = vpack.c.b16 %v1206, %v1205
        %v1210 = vpack.c.b16 %v1208, %v1207
        %v1214 = vsel %vm688, %v1200, 0
        %1216 = vmatprep.subr.bf16.mxu0 0
        %1217 = vmatpush1.bf16.msra.mxu0 %v1209
        %1218 = vmatprep.subr.bf16.mxu0 0
        %1219 = vmatpush1.bf16.msra.mxu0 %v1210
        %1220 = vmatprep.subr.bf16.mxu0 0
        %1221 = vmatpush1.bf16.msra.mxu0 0
        %1222 = vmatprep.subr.bf16.mxu0 0
        %1223 = vmatpush1.bf16.msra.mxu0 0
        %1224 = vmatprep.subr.bf16.mxu0 0
        %1225 = vmatpush1.bf16.msra.mxu0 0
        %1226 = vmatprep.subr.bf16.mxu0 0
        %1227 = vmatpush1.bf16.msra.mxu0 0
        %1228 = vmatprep.subr.bf16.mxu0 0
        %1229 = vmatpush1.bf16.msra.mxu0 0
        %1230 = vmatprep.subr.bf16.mxu0 0
        %1231 = vmatpush1.bf16.msra.mxu0 0
        %1232 = vmatprep.subr.bf16.mxu0 0
        %1233 = vmatpush1.bf16.msra.mxu0 0
        %1234 = vmatprep.subr.bf16.mxu0 0
        %1235 = vmatpush1.bf16.msra.mxu0 0
        %1236 = vmatprep.subr.bf16.mxu0 0
        %1237 = vmatpush1.bf16.msra.mxu0 0
        %1238 = vmatprep.subr.bf16.mxu0 0
        %1239 = vmatpush1.bf16.msra.mxu0 0
        %1240 = vmatprep.subr.bf16.mxu0 0
        %1241 = vmatpush1.bf16.msra.mxu0 0
        %1242 = vmatprep.subr.bf16.mxu0 0
        %1243 = vmatpush1.bf16.msra.mxu0 0
        %1244 = vmatprep.subr.bf16.mxu0 0
        %1245 = vmatpush1.bf16.msra.mxu0 0
        %1246 = vmatprep.subr.bf16.mxu0 0
        %1247 = vmatpush1.bf16.msra.mxu0 0
        %1248 = vmatprep.mubr.bf16.mxu0 0
        %1249 = vmatmul.mubr.bf16.gmra.mrb[0].mxu0 %v1214
        %v1250 = vpop.f32.mrb[0].mxu0
        %v1251 = vadd.f32 0.0, %v1250
        %v1252 = vpop.f32.mrb[0].mxu0
        %v1253 = vpop.f32.mrb[0].mxu0
        %v1254 = vpop.f32.mrb[0].mxu0
        %1255 = vdwg.mxu0
        %v1256 = vadd.f32 %v1193, %v1251
        %v1257 = vld [vmem:[%s6] sm:$0x1]
        %v1259 = vlaneseq
        %v1260 = vshrl.u32 %v1259, 7
        %v1261 = vsub.s32 0, %v1260
        %v1262 = vrot.slane %v1257, %v1261
        %v1264 = vadd.f32 %v1256, %v1262
        %v1265 = vpack.c.bf16 %v1264, %v1264
        %1266 = vst [vmem:[%s295] sm:$0xf] %v1265
        %s1267 = sand.u32 %s197, 1
        %s1268 = scalar_lea.sflag [#allocation3], %s1267
        %s1269 = sand.u32 %s197, 1
        %s1270 = smul.addr %s1269, 4
        %s1271 = scalar_lea.vmem [#allocation2], %s1270
        // Predicated region
        $region49: #{hmlp_stem_forward.1} parent=47 // pred_check
          %p1272 = pneg %p207
        $region50: #{hmlp_stem_forward.1} parent=47 // pred_check_branch
          %1274 = sbr.rel (%p1272) target = $region52
        $region51: #{hmlp_stem_forward.1} parent=47 // pred_region
          %s1276 = ssub.s32 64, 64
          %1277 = vsyncadd %s1268, %s1276
          %s1278 = smul.addr %s25, 2
          %s1279 = sadd.s32 %s26, %s1278
          %s1280 = smul.addr %s1279, 64
          %s1281 = scalar_lea.hbm %s7, %s1280
          %s1283 = sshll.u32 %s1271, 4
          %s1284 = int_to_ptr.vmem [resolvable:$true] %s1283
          %1286 = dma.vmem_to_hbm [thread:$0]  %s1284, 64, %s1281, %s1268
        $region52: #{hmlp_stem_forward.1} parent=47 // pred_fallthru
          _
      $region48: #{hmlp_stem_forward.1} parent=5 // pred_fallthru
        _
      %p1287 = scmp.le.s32.totalorder 2, %s16
      // Predicated region
      $region53: #{hmlp_stem_forward.1} parent=5 // pred_check
        %p1288 = pneg %p1287
      $region54: #{hmlp_stem_forward.1} parent=5 // pred_check_branch
        %1290 = sbr.rel (%p1288) target = $region56
      $region55: #{hmlp_stem_forward.1} parent=5 // pred_region
        %s1291 = ssub.s32 %s16, 2
        // Predicated region
        $region57: #{hmlp_stem_forward.1} parent=55 // pred_check
          %p1292 = pneg %p213
        $region58: #{hmlp_stem_forward.1} parent=55 // pred_check_branch
          %1294 = sbr.rel (%p1292) target = $region60
        $region59: #{hmlp_stem_forward.1} parent=55 // pred_region
          %s1295 = sand.u32 %s198, 1
          %s1296 = scalar_lea.sflag [#allocation3], %s1295
          %s1297 = sand.u32 %s198, 1
          %s1298 = smul.addr %s1297, 4
          %s1299 = scalar_lea.vmem [#allocation2], %s1298
          %1300 = dma.done %s1296, 64
        $region60: #{hmlp_stem_forward.1} parent=55 // pred_fallthru
          _
      $region56: #{hmlp_stem_forward.1} parent=5 // pred_fallthru
        _
    $region6: #{hmlp_stem_forward.1} parent=1 // loop_footer
      %s20 = sadd.s32 1, %s16
    $region7: #{hmlp_stem_forward.1} parent=1 // loop_footer_branch
      %15 = sbr.rel target = $region3
    $region8: #{hmlp_stem_forward.1} parent=1 // loop_exit
      _
    %1301 = vsyncpa [#allocation3], 1
    %s1302 = scalar_lea.sflag [#allocation3], 1
    %1303 = vsyncpa %s1302, 1

</llo_original>
